<compile_context>
chip_gen: v5e
topology: v5e:2x2
jax: 0.10.0
libtpu: 0.0.40
codegen_flags: <defaults>
</compile_context>

<pallas_src>
import jax
import jax.numpy as jnp
from jax import lax
from jax.experimental import pallas as pl
from jax.experimental.pallas import tpu as pltpu

BN_EPS = 1e-5
LN_EPS = 1e-5

# bias-bank row layout (each row zero-padded to 128 lanes, f32)
(ROW_B1, ROW_B2, ROW_B3, ROW_GIN, ROW_BIN, ROW_CQ, ROW_BM1, ROW_BM2,
 ROW_GOUT, ROW_BOUT, ROW_BD1, ROW_BD2, ROW_BD3, N_BANK_ROWS) = range(14)
BANK_LANES = 128


def _layernorm(x, gamma, beta):
    mu = jnp.mean(x, axis=-1, keepdims=True)
    var = jnp.mean((x - mu) ** 2, axis=-1, keepdims=True)
    return (x - mu) * lax.rsqrt(var + LN_EPS) * gamma + beta


# ----------------------------------------------------------------------------
# Fused kernel: one batch *block* (B_BLK elements) per grid step.
#   PSE: mlp1 (BN-folded Linear+ReLU x2) on (B*T*S) rows -> masked mean/std pooling
#        over pixels -> split-K mlp2 (BN-folded Linear)          -> spat (B, T, 128)
#   TAE: LayerNorm -> +pos enc -> folded-query multi-head attention (2 real matmuls)
#        -> head-blocked mlp3 layer-1 -> mlp3 layer-2 -> LayerNorm
#   Decoder: (BN-folded Linear+ReLU) x2 -> Linear (padded to 128 lanes)
# ----------------------------------------------------------------------------
def psetae_kernel(x_ref, mask_ref, extra_ref, pos_ref, bank_ref,
                  w1_ref, w2_ref, w3m_ref, w3s_ref, w3e_ref,
                  vqt_ref, wm1_ref, wm2_ref, wd1_ref, wd2_ref, wd3_ref,
                  out_ref):
    bb, t, s, c = x_ref.shape
    e = extra_ref.shape[-1]
    d_model = pos_ref.shape[-1]
    n_head = vqt_ref.shape[-1]
    f = w2_ref.shape[-1]                       # mlp1 output features (64)
    bt = bb * t
    bf16 = jnp.bfloat16

    def vec(row, n):                           # (1, n) f32 slice of the packed bias bank
        return bank_ref[row:row + 1, :n]

    # ------------------- PixelSetEncoder ------------------------------------
    # mlp1 pixel-wise; BN folded into (w, b); bf16 operands, f32 accumulation.
    x = x_ref[...].reshape(bb * t * s, c)                       # bf16 input
    h = jnp.dot(x, w1_ref[...], preferred_element_type=jnp.float32) \
        + vec(ROW_B1, w1_ref.shape[1])
    h = jnp.maximum(h, 0.0)
    h = jnp.dot(h.astype(bf16), w2_ref[...],
                preferred_element_type=jnp.float32) + vec(ROW_B2, f)
    h = jnp.maximum(h, 0.0)
    h = h.reshape(bb, t, s, f)

    # masked mean / std pooling over pixels (matches masked_mean / masked_std)
    mask = mask_ref[...]                                        # (bb, t, s) f32
    m = mask[..., None]
    msum = jnp.sum(mask, axis=-1, keepdims=True)                # (bb, t, 1)
    msafe = jnp.maximum(msum, 1.0)                              # guard all-masked sets
    mean = jnp.sum(h * m, axis=2) * pl.reciprocal(msafe, approx=True)   # (bb, t, f)
    denom = jnp.maximum(msafe - 1.0, 1.0)                       # d[d==1]=2 -> (d-1)
    var = jnp.sum(((h - mean[:, :, None, :]) * m) ** 2, axis=2) \
        * pl.reciprocal(denom, approx=True)
    std = jnp.sqrt(var + 1e-31)                                 # 10e-32 in torch code

    # mlp2 (Linear+BN folded), concat-free: split-K matmuls summed
    spat = (jnp.dot(mean.reshape(bt, f).astype(bf16), w3m_ref[...],
                    preferred_element_type=jnp.float32)
            + jnp.dot(std.reshape(bt, f).astype(bf16), w3s_ref[...],
                      preferred_element_type=jnp.float32)
            + jnp.dot(extra_ref[...].reshape(bt, e), w3e_ref[...],
                      preferred_element_type=jnp.float32)
            + vec(ROW_B3, d_model))                             # (bt, 128)

    # ------------------- TemporalAttentionEncoder ---------------------------
    xn = _layernorm(spat.reshape(bb, t, d_model),
                    vec(ROW_GIN, d_model), vec(ROW_BIN, d_model))
    enc = xn + pos_ref[...][None, :, :]                         # (bb, t, 128)

    # scores with the master queries folded into the key projection: one matmul
    sc = (jnp.dot(enc.reshape(bt, d_model), vqt_ref[...],
                  preferred_element_type=jnp.float32)
          + vec(ROW_CQ, n_head)).reshape(bb, t, n_head)
    sc = sc - jnp.max(sc, axis=1, keepdims=True)                # softmax over sequence
    p = jnp.exp(sc)
    attn = p * pl.reciprocal(jnp.sum(p, axis=1, keepdims=True), approx=True)

    # per-head weighted sums as ONE batched matmul: (bb,H,T) @ (bb,T,128) -> (bb,H,128)
    heads = jnp.einsum('bht,btd->bhd', jnp.swapaxes(attn, 1, 2), enc,
                       preferred_element_type=jnp.float32)

    # mlp3 layer 1 fused with the head concat: head-blocked split-K matmuls (M = bb)
    d3 = wm2_ref.shape[0]
    o = jnp.zeros((bb, d3), jnp.float32)
    for hh in range(n_head):                                    # 4 matmuls, M=B_BLK each
        o = o + jnp.dot(heads[:, hh, :].astype(bf16),
                        wm1_ref[hh * d_model:(hh + 1) * d_model, :],
                        preferred_element_type=jnp.float32)
    o = jnp.maximum(o + vec(ROW_BM1, d3), 0.0)
    o = jnp.maximum(jnp.dot(o.astype(bf16), wm2_ref[...],
                            preferred_element_type=jnp.float32)
                    + vec(ROW_BM2, wm2_ref.shape[1]), 0.0)
    o = _layernorm(o, vec(ROW_GOUT, wm2_ref.shape[1]),
                   vec(ROW_BOUT, wm2_ref.shape[1]))             # dropout = identity (eval)

    # ------------------- Decoder mlp4 ----------------------------------------
    o = jnp.maximum(jnp.dot(o.astype(bf16), wd1_ref[...],
                            preferred_element_type=jnp.float32)
                    + vec(ROW_BD1, wd1_ref.shape[1]), 0.0)
    o = jnp.maximum(jnp.dot(o.astype(bf16), wd2_ref[...],
                            preferred_element_type=jnp.float32)
                    + vec(ROW_BD2, wd2_ref.shape[1]), 0.0)
    out_ref[...] = (jnp.dot(o.astype(bf16), wd3_ref[...],
                            preferred_element_type=jnp.float32)
                    + vec(ROW_BD3, wd3_ref.shape[1]))           # (bb, 128 padded)


# ----------------------------------------------------------------------------
# Parameter init (deterministic, synthetic) with BN / query folding
# ----------------------------------------------------------------------------
def init_params(key, input_dim=10, mlp1=(10, 32, 64), mlp2=(132, 128), extra_size=4,
                n_head=4, d_k=32, mlp3=(512, 128, 128), mlp4=(128, 64, 32, 20)):
    keys = iter(jax.random.split(key, 40))

    def lin(fi, fo):
        k1, k2 = jax.random.split(next(keys))
        w = jax.random.normal(k1, (fi, fo), jnp.float32) / jnp.sqrt(jnp.float32(fi))
        b = 0.01 * jax.random.normal(k2, (1, fo), jnp.float32)
        return w, b

    def bn(n):
        # eval-mode BatchNorm with running_mean=0, running_var=1
        k1, k2 = jax.random.split(next(keys))
        gamma = 1.0 + 0.05 * jax.random.normal(k1, (1, n), jnp.float32)
        beta = 0.05 * jax.random.normal(k2, (1, n), jnp.float32)
        return gamma / jnp.sqrt(1.0 + BN_EPS), beta

    def fold(w, b, scale, shift):
        # Linear followed by eval-BN  ->  y = x @ (W*s) + (b*s + t)
        return w * scale, b * scale + shift

    def ln(n):
        k1, k2 = jax.random.split(next(keys))
        return (1.0 + 0.05 * jax.random.normal(k1, (1, n), jnp.float32),
                0.05 * jax.random.normal(k2, (1, n), jnp.float32))

    d_model = mlp2[1]
    # --- PixelSetEncoder ---
    w1, b1 = fold(*lin(mlp1[0], mlp1[1]), *bn(mlp1[1]))
    w2, b2 = fold(*lin(mlp1[1], mlp1[2]), *bn(mlp1[2]))
    w3, b3 = fold(*lin(mlp2[0], mlp2[1]), *bn(mlp2[1]))
    f = mlp1[2]
    w3m, w3s, w3e = w3[:f], w3[f:2 * f], w3[2 * f:2 * f + extra_size]   # split-K slices

    # --- TemporalAttentionEncoder ---
    gin, bin_ = ln(d_model)
    wk, bk = lin(d_model, n_head * d_k)
    q = jax.random.normal(next(keys), (n_head, d_k), jnp.float32) * jnp.sqrt(2.0 / d_k)
    temp = jnp.sqrt(jnp.float32(d_k))
    # fold master queries into the key projection:
    #   score[t,h] = (enc[t] . V[:,h] + c[h]) / sqrt(d_k)
    vq = jnp.einsum('dhk,hk->hd', wk.reshape(d_model, n_head, d_k), q) / temp   # (H, D)
    cq = jnp.sum(bk.reshape(n_head, d_k) * q, axis=-1) / temp                    # (H,)
    vqt = jnp.transpose(vq)                                                      # (D, H), f32

    wm1, bm1 = fold(*lin(mlp3[0], mlp3[1]), *bn(mlp3[1]))     # kept flat (512, 128)
    wm2, bm2 = fold(*lin(mlp3[1], mlp3[2]), *bn(mlp3[2]))
    gout, bout = ln(mlp3[2])

    # --- Decoder (mlp4) ---
    wd1, bd1 = fold(*lin(mlp4[0], mlp4[1]), *bn(mlp4[1]))
    wd2, bd2 = fold(*lin(mlp4[1], mlp4[2]), *bn(mlp4[2]))
    wd3, bd3 = lin(mlp4[2], mlp4[3])
    out_pad = ((mlp4[3] + 127) // 128) * 128                  # lane-dense padded logits
    wd3p = jnp.zeros((mlp4[2], out_pad), jnp.float32).at[:, :mlp4[3]].set(wd3)

    # packed bias / gamma / beta bank: one (13, 128) f32 operand instead of 13 vectors
    bank = jnp.zeros((N_BANK_ROWS, BANK_LANES), jnp.float32)

    def put(bk_arr, row, v):
        v = jnp.reshape(v, (-1,))
        return bk_arr.at[row, :v.shape[0]].set(v)

    for row, v in [(ROW_B1, b1), (ROW_B2, b2), (ROW_B3, b3), (ROW_GIN, gin),
                   (ROW_BIN, bin_), (ROW_CQ, cq), (ROW_BM1, bm1), (ROW_BM2, bm2),
                   (ROW_GOUT, gout), (ROW_BOUT, bout), (ROW_BD1, bd1),
                   (ROW_BD2, bd2), (ROW_BD3, bd3)]:
        bank = put(bank, row, v)

    bf = jnp.bfloat16
    mats = [w1.astype(bf), w2.astype(bf), w3m.astype(bf), w3s.astype(bf), w3e.astype(bf),
            vqt,                                   # f32: feeds softmax logits directly
            wm1.astype(bf), wm2.astype(bf), wd1.astype(bf), wd2.astype(bf), wd3p.astype(bf)]
    return {"mats": mats, "bank": bank, "n_classes": mlp4[3], "d_model": d_model,
            "n_head": n_head, "out_pad": out_pad}


def sinusoid_table(positions, d_hid, T=1000.0):
    pos = jnp.asarray(positions, jnp.float32)[:, None]
    j = jnp.arange(d_hid)
    angle = pos / jnp.power(jnp.float32(T), (2.0 * (j // 2)) / d_hid)
    return jnp.where(j % 2 == 0, jnp.sin(angle), jnp.cos(angle)).astype(jnp.float32)


# ----------------------------------------------------------------------------
# Wrapper / glue
# ----------------------------------------------------------------------------
def psetae_forward(pixels, mask, extra, params, b_blk=None):
    """pixels: (B, T, C, S), mask: (B, T, S), extra: (B, T, E) -> logits (B, n_classes)."""
    B, T, C, S = pixels.shape
    E = extra.shape[-1]
    d_model = params["d_model"]
    n_classes = params["n_classes"]
    out_pad = params["out_pad"]
    mats, bank = params["mats"], params["bank"]

    # Batch block size: amortize per-step pipeline overhead and fill the MXU; sized so
    # the live (T, S, 64) f32 activations stay well inside v7x's 64 MiB VMEM.
    if b_blk is None:
        per_elem = 4 * T * S * (C + 4 * 64)                 # rough live bytes / element
        b_blk = max(1, min(B, 128, (16 << 20) // max(per_elem, 1)))
        if B >= 16:                                         # >=2 grid steps for v7x's 2 TCs
            b_blk = min(b_blk, -(-B // 2))
    if B <= 8 or b_blk >= B:
        b_blk = B                                           # single block == full out dims
    else:
        b_blk = max(8, (b_blk // 8) * 8)                    # keep (b_blk,128) out tiles aligned
    n_blk = -(-B // b_blk)
    b_pad = n_blk * b_blk

    # channel-last + bf16 once at data-prep time (halves input DMA bytes).
    # TODO(synk): fold this layout change into the kernel DMA to avoid one XLA HBM pass.
    x = jnp.transpose(pixels, (0, 1, 3, 2)).astype(jnp.bfloat16)     # (B, T, S, C)
    extra_bf = extra.astype(jnp.bfloat16)
    mask_f = mask.astype(jnp.float32)
    if b_pad != B:
        x = jnp.pad(x, ((0, b_pad - B), (0, 0), (0, 0), (0, 0)))
        mask_f = jnp.pad(mask_f, ((0, b_pad - B), (0, 0), (0, 0)))
        extra_bf = jnp.pad(extra_bf, ((0, b_pad - B), (0, 0), (0, 0)))

    # positions=None in the reference -> src_pos = arange(1, T+1)
    pos = sinusoid_table(jnp.arange(1, T + 1), d_model, 1000.0)      # (T, d_model)

    data_specs = [
        pl.BlockSpec((b_blk, T, S, C), lambda i: (i, 0, 0, 0)),
        pl.BlockSpec((b_blk, T, S), lambda i: (i, 0, 0)),
        pl.BlockSpec((b_blk, T, E), lambda i: (i, 0, 0)),
        pl.BlockSpec((T, d_model), lambda i: (0, 0)),
        pl.BlockSpec(bank.shape, lambda i: (0, 0)),
    ]
    w_specs = [pl.BlockSpec(m.shape, lambda i, nd=m.ndim: (0,) * nd) for m in mats]

    out = pl.pallas_call(
        psetae_kernel,
        out_shape=jax.ShapeDtypeStruct((b_pad, out_pad), jnp.float32),
        grid=(n_blk,),
        in_specs=data_specs + w_specs,
        out_specs=pl.BlockSpec((b_blk, out_pad), lambda i: (i, 0)),
        compiler_params=pltpu.CompilerParams(
            dimension_semantics=("parallel",),
            vmem_limit_bytes=64 * 1024 * 1024),
    )(x, mask_f, extra_bf, pos, bank, *mats)

    return out[:B, :n_classes]


if __name__ == "__main__":
    B, SEQ, C, NPIX, E = 2, 8, 10, 16, 4
    key = jax.random.PRNGKey(0)
    k_x, k_m, k_e, k_p = jax.random.split(key, 4)

    pixels = jax.random.normal(k_x, (B, SEQ, C, NPIX), jnp.float32)
    mask = (jax.random.uniform(k_m, (B, SEQ, NPIX)) > 0.3).astype(jnp.float32)
    mask = mask.at[..., 0].set(1.0)                      # ensure >=1 valid pixel
    extra = jax.random.normal(k_e, (B, SEQ, E), jnp.float32)

    params = init_params(k_p)
    logits = psetae_forward(pixels, mask, extra, params)
    logits = jax.block_until_ready(logits)

    assert logits.shape == (B, 20), logits.shape
    assert bool(jnp.all(jnp.isfinite(logits)))
    print("KERNEL_OK")
</pallas_src>

<mosaic_0001>
module attributes {stable_mosaic.version = 11 : i64} {
  func.func @psetae_kernel(%arg0: i32, %arg1: memref<2x8x16x10xbf16, #tpu.memory_space<vmem>>, %arg2: memref<2x8x16xf32, #tpu.memory_space<vmem>>, %arg3: memref<2x8x4xbf16, #tpu.memory_space<vmem>>, %arg4: memref<8x128xf32, #tpu.memory_space<vmem>>, %arg5: memref<13x128xf32, #tpu.memory_space<vmem>>, %arg6: memref<10x32xbf16, #tpu.memory_space<vmem>>, %arg7: memref<32x64xbf16, #tpu.memory_space<vmem>>, %arg8: memref<64x128xbf16, #tpu.memory_space<vmem>>, %arg9: memref<64x128xbf16, #tpu.memory_space<vmem>>, %arg10: memref<4x128xbf16, #tpu.memory_space<vmem>>, %arg11: memref<128x4xf32, #tpu.memory_space<vmem>>, %arg12: memref<512x128xbf16, #tpu.memory_space<vmem>>, %arg13: memref<128x128xbf16, #tpu.memory_space<vmem>>, %arg14: memref<128x64xbf16, #tpu.memory_space<vmem>>, %arg15: memref<64x32xbf16, #tpu.memory_space<vmem>>, %arg16: memref<32x128xbf16, #tpu.memory_space<vmem>>, %arg17: memref<2x128xf32, #tpu.memory_space<vmem>>) attributes {dimension_semantics = [#tpu.dimension_semantics<parallel>], iteration_bounds = array<i64: 1>, scalar_prefetch = 0 : i64, scratch_operands = 0 : i64, tpu.core_type = #tpu.core_type<tc>, window_params = [{transform_indices = @transform_0, window_bounds = array<i64: 2, 8, 16, 10>}, {transform_indices = @transform_1, window_bounds = array<i64: 2, 8, 16>}, {transform_indices = @transform_2, window_bounds = array<i64: 2, 8, 4>}, {pipeline_mode = #tpu.pipeline_mode<synchronous>, transform_indices = @transform_3, window_bounds = array<i64: 8, 128>}, {pipeline_mode = #tpu.pipeline_mode<synchronous>, transform_indices = @transform_4, window_bounds = array<i64: 13, 128>}, {pipeline_mode = #tpu.pipeline_mode<synchronous>, transform_indices = @transform_5, window_bounds = array<i64: 10, 32>}, {pipeline_mode = #tpu.pipeline_mode<synchronous>, transform_indices = @transform_6, window_bounds = array<i64: 32, 64>}, {pipeline_mode = #tpu.pipeline_mode<synchronous>, transform_indices = @transform_7, window_bounds = array<i64: 64, 128>}, {pipeline_mode = #tpu.pipeline_mode<synchronous>, transform_indices = @transform_8, window_bounds = array<i64: 64, 128>}, {pipeline_mode = #tpu.pipeline_mode<synchronous>, transform_indices = @transform_9, window_bounds = array<i64: 4, 128>}, {pipeline_mode = #tpu.pipeline_mode<synchronous>, transform_indices = @transform_10, window_bounds = array<i64: 128, 4>}, {pipeline_mode = #tpu.pipeline_mode<synchronous>, transform_indices = @transform_11, window_bounds = array<i64: 512, 128>}, {pipeline_mode = #tpu.pipeline_mode<synchronous>, transform_indices = @transform_12, window_bounds = array<i64: 128, 128>}, {pipeline_mode = #tpu.pipeline_mode<synchronous>, transform_indices = @transform_13, window_bounds = array<i64: 128, 64>}, {pipeline_mode = #tpu.pipeline_mode<synchronous>, transform_indices = @transform_14, window_bounds = array<i64: 64, 32>}, {pipeline_mode = #tpu.pipeline_mode<synchronous>, transform_indices = @transform_15, window_bounds = array<i64: 32, 128>}, {transform_indices = @transform_16, window_bounds = array<i64: 2, 128>}]} {
    %c0 = arith.constant 0 : index
    %c0_0 = arith.constant 0 : index
    %c0_1 = arith.constant 0 : index
    %c0_2 = arith.constant 0 : index
    %0 = vector.load %arg1[%c0, %c0_0, %c0_1, %c0_2] : memref<2x8x16x10xbf16, #tpu.memory_space<vmem>>, vector<2x8x16x10xbf16>
    %1 = vector.shape_cast %0 : vector<2x8x16x10xbf16> to vector<256x10xbf16>
    %c0_3 = arith.constant 0 : index
    %c0_4 = arith.constant 0 : index
    %2 = vector.load %arg6[%c0_3, %c0_4] : memref<10x32xbf16, #tpu.memory_space<vmem>>, vector<10x32xbf16>
    %cst = arith.constant dense<0.000000e+00> : vector<256x32xf32>
    %3 = tpu.matmul %1, %2, %cst {dimension_numbers = #tpu.dot_dimension_numbers<[1], [0], [0], [1], [0, 0, 1, 1], [], []>} : vector<256x10xbf16>, vector<10x32xbf16>, vector<256x32xf32> -> vector<256x32xf32>
    %c0_5 = arith.constant 0 : index
    %c0_6 = arith.constant 0 : index
    %4 = vector.load %arg5[%c0_5, %c0_6] : memref<13x128xf32, #tpu.memory_space<vmem>>, vector<1x32xf32>
    %5 = vector.broadcast %4 : vector<1x32xf32> to vector<256x32xf32>
    %6 = arith.addf %3, %5 : vector<256x32xf32>
    %cst_7 = arith.constant 0.000000e+00 : f32
    %7 = vector.broadcast %cst_7 : f32 to vector<256x32xf32>
    %8 = arith.maximumf %6, %7 : vector<256x32xf32>
    %9 = arith.truncf %8 : vector<256x32xf32> to vector<256x32xbf16>
    %c0_8 = arith.constant 0 : index
    %c0_9 = arith.constant 0 : index
    %10 = vector.load %arg7[%c0_8, %c0_9] : memref<32x64xbf16, #tpu.memory_space<vmem>>, vector<32x64xbf16>
    %cst_10 = arith.constant dense<0.000000e+00> : vector<256x64xf32>
    %11 = tpu.matmul %9, %10, %cst_10 {dimension_numbers = #tpu.dot_dimension_numbers<[1], [0], [0], [1], [0, 0, 1, 1], [], []>} : vector<256x32xbf16>, vector<32x64xbf16>, vector<256x64xf32> -> vector<256x64xf32>
    %c1 = arith.constant 1 : index
    %c0_11 = arith.constant 0 : index
    %12 = vector.load %arg5[%c1, %c0_11] : memref<13x128xf32, #tpu.memory_space<vmem>>, vector<1x64xf32>
    %13 = vector.broadcast %12 : vector<1x64xf32> to vector<256x64xf32>
    %14 = arith.addf %11, %13 : vector<256x64xf32>
    %cst_12 = arith.constant 0.000000e+00 : f32
    %15 = vector.broadcast %cst_12 : f32 to vector<256x64xf32>
    %16 = arith.maximumf %14, %15 : vector<256x64xf32>
    %17 = vector.shape_cast %16 : vector<256x64xf32> to vector<2x8x16x64xf32>
    %c0_13 = arith.constant 0 : index
    %c0_14 = arith.constant 0 : index
    %c0_15 = arith.constant 0 : index
    %18 = vector.load %arg2[%c0_13, %c0_14, %c0_15] : memref<2x8x16xf32, #tpu.memory_space<vmem>>, vector<2x8x16xf32>
    %19 = vector.shape_cast %18 : vector<2x8x16xf32> to vector<2x8x16x1xf32>
    %cst_16 = arith.constant dense<0.000000e+00> : vector<2x8xf32>
    %20 = vector.multi_reduction <add>, %18, %cst_16 [2] : vector<2x8x16xf32> to vector<2x8xf32>
    %21 = vector.shape_cast %20 : vector<2x8xf32> to vector<2x8x1xf32>
    %cst_17 = arith.constant 1.000000e+00 : f32
    %22 = vector.broadcast %cst_17 : f32 to vector<2x8x1xf32>
    %23 = arith.maximumf %21, %22 : vector<2x8x1xf32>
    %24 = vector.broadcast %19 : vector<2x8x16x1xf32> to vector<2x8x16x64xf32>
    %25 = arith.mulf %17, %24 : vector<2x8x16x64xf32>
    %cst_18 = arith.constant dense<0.000000e+00> : vector<2x8x64xf32>
    %26 = vector.multi_reduction <add>, %25, %cst_18 [2] : vector<2x8x16x64xf32> to vector<2x8x64xf32>
    %27 = tpu.reciprocal %23 {approx = true} : vector<2x8x1xf32> -> vector<2x8x1xf32>
    %28 = vector.broadcast %27 : vector<2x8x1xf32> to vector<2x8x64xf32>
    %29 = arith.mulf %26, %28 : vector<2x8x64xf32>
    %cst_19 = arith.constant 1.000000e+00 : f32
    %30 = vector.broadcast %cst_19 : f32 to vector<2x8x1xf32>
    %31 = arith.subf %23, %30 : vector<2x8x1xf32>
    %cst_20 = arith.constant 1.000000e+00 : f32
    %32 = vector.broadcast %cst_20 : f32 to vector<2x8x1xf32>
    %33 = arith.maximumf %31, %32 : vector<2x8x1xf32>
    %34 = vector.shape_cast %29 : vector<2x8x64xf32> to vector<2x8x1x64xf32>
    %35 = vector.broadcast %34 : vector<2x8x1x64xf32> to vector<2x8x16x64xf32>
    %36 = arith.subf %17, %35 : vector<2x8x16x64xf32>
    %37 = vector.broadcast %19 : vector<2x8x16x1xf32> to vector<2x8x16x64xf32>
    %38 = arith.mulf %36, %37 : vector<2x8x16x64xf32>
    %39 = arith.mulf %38, %38 : vector<2x8x16x64xf32>
    %cst_21 = arith.constant dense<0.000000e+00> : vector<2x8x64xf32>
    %40 = vector.multi_reduction <add>, %39, %cst_21 [2] : vector<2x8x16x64xf32> to vector<2x8x64xf32>
    %41 = tpu.reciprocal %33 {approx = true} : vector<2x8x1xf32> -> vector<2x8x1xf32>
    %42 = vector.broadcast %41 : vector<2x8x1xf32> to vector<2x8x64xf32>
    %43 = arith.mulf %40, %42 : vector<2x8x64xf32>
    %cst_22 = arith.constant 9.99999979E-32 : f32
    %44 = vector.broadcast %cst_22 : f32 to vector<2x8x64xf32>
    %45 = arith.addf %43, %44 : vector<2x8x64xf32>
    %46 = math.sqrt %45 : vector<2x8x64xf32>
    %47 = vector.shape_cast %29 : vector<2x8x64xf32> to vector<16x64xf32>
    %48 = arith.truncf %47 : vector<16x64xf32> to vector<16x64xbf16>
    %c0_23 = arith.constant 0 : index
    %c0_24 = arith.constant 0 : index
    %49 = vector.load %arg8[%c0_23, %c0_24] : memref<64x128xbf16, #tpu.memory_space<vmem>>, vector<64x128xbf16>
    %cst_25 = arith.constant dense<0.000000e+00> : vector<16x128xf32>
    %50 = tpu.matmul %48, %49, %cst_25 {dimension_numbers = #tpu.dot_dimension_numbers<[1], [0], [0], [1], [0, 0, 1, 1], [], []>} : vector<16x64xbf16>, vector<64x128xbf16>, vector<16x128xf32> -> vector<16x128xf32>
    %51 = vector.shape_cast %46 : vector<2x8x64xf32> to vector<16x64xf32>
    %52 = arith.truncf %51 : vector<16x64xf32> to vector<16x64xbf16>
    %c0_26 = arith.constant 0 : index
    %c0_27 = arith.constant 0 : index
    %53 = vector.load %arg9[%c0_26, %c0_27] : memref<64x128xbf16, #tpu.memory_space<vmem>>, vector<64x128xbf16>
    %cst_28 = arith.constant dense<0.000000e+00> : vector<16x128xf32>
    %54 = tpu.matmul %52, %53, %cst_28 {dimension_numbers = #tpu.dot_dimension_numbers<[1], [0], [0], [1], [0, 0, 1, 1], [], []>} : vector<16x64xbf16>, vector<64x128xbf16>, vector<16x128xf32> -> vector<16x128xf32>
    %55 = arith.addf %50, %54 : vector<16x128xf32>
    %c0_29 = arith.constant 0 : index
    %c0_30 = arith.constant 0 : index
    %c0_31 = arith.constant 0 : index
    %56 = vector.load %arg3[%c0_29, %c0_30, %c0_31] : memref<2x8x4xbf16, #tpu.memory_space<vmem>>, vector<2x8x4xbf16>
    %57 = vector.shape_cast %56 : vector<2x8x4xbf16> to vector<16x4xbf16>
    %c0_32 = arith.constant 0 : index
    %c0_33 = arith.constant 0 : index
    %58 = vector.load %arg10[%c0_32, %c0_33] : memref<4x128xbf16, #tpu.memory_space<vmem>>, vector<4x128xbf16>
    %cst_34 = arith.constant dense<0.000000e+00> : vector<16x128xf32>
    %59 = tpu.matmul %57, %58, %cst_34 {dimension_numbers = #tpu.dot_dimension_numbers<[1], [0], [0], [1], [0, 0, 1, 1], [], []>} : vector<16x4xbf16>, vector<4x128xbf16>, vector<16x128xf32> -> vector<16x128xf32>
    %60 = arith.addf %55, %59 : vector<16x128xf32>
    %c2 = arith.constant 2 : index
    %c0_35 = arith.constant 0 : index
    %61 = vector.load %arg5[%c2, %c0_35] : memref<13x128xf32, #tpu.memory_space<vmem>>, vector<1x128xf32>
    %62 = vector.broadcast %61 : vector<1x128xf32> to vector<16x128xf32>
    %63 = arith.addf %60, %62 : vector<16x128xf32>
    %64 = vector.shape_cast %63 : vector<16x128xf32> to vector<2x8x128xf32>
    %c3 = arith.constant 3 : index
    %c0_36 = arith.constant 0 : index
    %65 = vector.load %arg5[%c3, %c0_36] : memref<13x128xf32, #tpu.memory_space<vmem>>, vector<1x128xf32>
    %c4 = arith.constant 4 : index
    %c0_37 = arith.constant 0 : index
    %66 = vector.load %arg5[%c4, %c0_37] : memref<13x128xf32, #tpu.memory_space<vmem>>, vector<1x128xf32>
    %cst_38 = arith.constant dense<0.000000e+00> : vector<2x8xf32>
    %67 = vector.multi_reduction <add>, %64, %cst_38 [2] : vector<2x8x128xf32> to vector<2x8xf32>
    %68 = vector.shape_cast %67 : vector<2x8xf32> to vector<2x8x1xf32>
    %cst_39 = arith.constant 1.280000e+02 : f32
    %69 = vector.broadcast %cst_39 : f32 to vector<2x8x1xf32>
    %70 = arith.divf %68, %69 : vector<2x8x1xf32>
    %71 = vector.broadcast %70 : vector<2x8x1xf32> to vector<2x8x128xf32>
    %72 = arith.subf %64, %71 : vector<2x8x128xf32>
    %73 = arith.mulf %72, %72 : vector<2x8x128xf32>
    %cst_40 = arith.constant dense<0.000000e+00> : vector<2x8xf32>
    %74 = vector.multi_reduction <add>, %73, %cst_40 [2] : vector<2x8x128xf32> to vector<2x8xf32>
    %75 = vector.shape_cast %74 : vector<2x8xf32> to vector<2x8x1xf32>
    %cst_41 = arith.constant 1.280000e+02 : f32
    %76 = vector.broadcast %cst_41 : f32 to vector<2x8x1xf32>
    %77 = arith.divf %75, %76 : vector<2x8x1xf32>
    %78 = vector.broadcast %70 : vector<2x8x1xf32> to vector<2x8x128xf32>
    %79 = arith.subf %64, %78 : vector<2x8x128xf32>
    %cst_42 = arith.constant 9.99999974E-6 : f32
    %80 = vector.broadcast %cst_42 : f32 to vector<2x8x1xf32>
    %81 = arith.addf %77, %80 : vector<2x8x1xf32>
    %82 = math.rsqrt %81 : vector<2x8x1xf32>
    %83 = vector.broadcast %82 : vector<2x8x1xf32> to vector<2x8x128xf32>
    %84 = arith.mulf %79, %83 : vector<2x8x128xf32>
    %85 = vector.shape_cast %65 : vector<1x128xf32> to vector<1x1x128xf32>
    %86 = vector.broadcast %85 : vector<1x1x128xf32> to vector<2x8x128xf32>
    %87 = arith.mulf %84, %86 : vector<2x8x128xf32>
    %88 = vector.shape_cast %66 : vector<1x128xf32> to vector<1x1x128xf32>
    %89 = vector.broadcast %88 : vector<1x1x128xf32> to vector<2x8x128xf32>
    %90 = arith.addf %87, %89 : vector<2x8x128xf32>
    %c0_43 = arith.constant 0 : index
    %c0_44 = arith.constant 0 : index
    %91 = vector.load %arg4[%c0_43, %c0_44] : memref<8x128xf32, #tpu.memory_space<vmem>>, vector<8x128xf32>
    %92 = vector.shape_cast %91 : vector<8x128xf32> to vector<1x8x128xf32>
    %93 = vector.broadcast %92 : vector<1x8x128xf32> to vector<2x8x128xf32>
    %94 = arith.addf %90, %93 : vector<2x8x128xf32>
    %95 = vector.shape_cast %94 : vector<2x8x128xf32> to vector<16x128xf32>
    %c0_45 = arith.constant 0 : index
    %c0_46 = arith.constant 0 : index
    %96 = vector.load %arg11[%c0_45, %c0_46] : memref<128x4xf32, #tpu.memory_space<vmem>>, vector<128x4xf32>
    %cst_47 = arith.constant dense<0.000000e+00> : vector<16x4xf32>
    %97 = tpu.matmul %95, %96, %cst_47 {dimension_numbers = #tpu.dot_dimension_numbers<[1], [0], [0], [1], [0, 0, 1, 1], [], []>} : vector<16x128xf32>, vector<128x4xf32>, vector<16x4xf32> -> vector<16x4xf32>
    %c5 = arith.constant 5 : index
    %c0_48 = arith.constant 0 : index
    %98 = vector.load %arg5[%c5, %c0_48] : memref<13x128xf32, #tpu.memory_space<vmem>>, vector<1x4xf32>
    %99 = vector.broadcast %98 : vector<1x4xf32> to vector<16x4xf32>
    %100 = arith.addf %97, %99 : vector<16x4xf32>
    %101 = vector.shape_cast %100 : vector<16x4xf32> to vector<2x8x4xf32>
    %cst_49 = arith.constant dense<0xFF800000> : vector<2x4xf32>
    %102 = vector.multi_reduction <maximumf>, %101, %cst_49 [1] : vector<2x8x4xf32> to vector<2x4xf32>
    %103 = vector.shape_cast %102 : vector<2x4xf32> to vector<2x1x4xf32>
    %104 = vector.broadcast %103 : vector<2x1x4xf32> to vector<2x8x4xf32>
    %105 = arith.subf %101, %104 : vector<2x8x4xf32>
    %106 = math.exp %105 : vector<2x8x4xf32>
    %cst_50 = arith.constant dense<0.000000e+00> : vector<2x4xf32>
    %107 = vector.multi_reduction <add>, %106, %cst_50 [1] : vector<2x8x4xf32> to vector<2x4xf32>
    %108 = vector.shape_cast %107 : vector<2x4xf32> to vector<2x1x4xf32>
    %109 = tpu.reciprocal %108 {approx = true} : vector<2x1x4xf32> -> vector<2x1x4xf32>
    %110 = vector.broadcast %109 : vector<2x1x4xf32> to vector<2x8x4xf32>
    %111 = arith.mulf %106, %110 : vector<2x8x4xf32>
    %112 = tpu.transpose %111, [0, 2, 1] : vector<2x8x4xf32> -> vector<2x4x8xf32>
    "tpu.trace_start"() <{level = 10 : i32, message = "bht,btd->bhd"}> : () -> ()
    %cst_51 = arith.constant dense<0.000000e+00> : vector<2x4x128xf32>
    %113 = tpu.matmul %112, %94, %cst_51 {dimension_numbers = #tpu.dot_dimension_numbers<[2], [1], [1], [2], [0, 0, 0, 1, 1, 2], [0], [0]>} : vector<2x4x8xf32>, vector<2x8x128xf32>, vector<2x4x128xf32> -> vector<2x4x128xf32>
    %cst_52 = arith.constant 0.000000e+00 : f32
    "tpu.trace_stop"() : () -> ()
    %114 = vector.broadcast %cst_52 : f32 to vector<2x128xf32>
    %115 = vector.extract_strided_slice %113 {offsets = [0, 0, 0], sizes = [2, 1, 128], strides = [1, 1, 1]} : vector<2x4x128xf32> to vector<2x1x128xf32>
    %116 = vector.shape_cast %115 : vector<2x1x128xf32> to vector<2x128xf32>
    %117 = arith.truncf %116 : vector<2x128xf32> to vector<2x128xbf16>
    %c0_53 = arith.constant 0 : index
    %c0_54 = arith.constant 0 : index
    %118 = vector.load %arg12[%c0_53, %c0_54] : memref<512x128xbf16, #tpu.memory_space<vmem>>, vector<128x128xbf16>
    %cst_55 = arith.constant dense<0.000000e+00> : vector<2x128xf32>
    %119 = tpu.matmul %117, %118, %cst_55 {dimension_numbers = #tpu.dot_dimension_numbers<[1], [0], [0], [1], [0, 0, 1, 1], [], []>} : vector<2x128xbf16>, vector<128x128xbf16>, vector<2x128xf32> -> vector<2x128xf32>
    %120 = arith.addf %114, %119 : vector<2x128xf32>
    %121 = vector.extract_strided_slice %113 {offsets = [0, 1, 0], sizes = [2, 1, 128], strides = [1, 1, 1]} : vector<2x4x128xf32> to vector<2x1x128xf32>
    %122 = vector.shape_cast %121 : vector<2x1x128xf32> to vector<2x128xf32>
    %123 = arith.truncf %122 : vector<2x128xf32> to vector<2x128xbf16>
    %c128 = arith.constant 128 : index
    %c0_56 = arith.constant 0 : index
    %124 = vector.load %arg12[%c128, %c0_56] : memref<512x128xbf16, #tpu.memory_space<vmem>>, vector<128x128xbf16>
    %cst_57 = arith.constant dense<0.000000e+00> : vector<2x128xf32>
    %125 = tpu.matmul %123, %124, %cst_57 {dimension_numbers = #tpu.dot_dimension_numbers<[1], [0], [0], [1], [0, 0, 1, 1], [], []>} : vector<2x128xbf16>, vector<128x128xbf16>, vector<2x128xf32> -> vector<2x128xf32>
    %126 = arith.addf %120, %125 : vector<2x128xf32>
    %127 = vector.extract_strided_slice %113 {offsets = [0, 2, 0], sizes = [2, 1, 128], strides = [1, 1, 1]} : vector<2x4x128xf32> to vector<2x1x128xf32>
    %128 = vector.shape_cast %127 : vector<2x1x128xf32> to vector<2x128xf32>
    %129 = arith.truncf %128 : vector<2x128xf32> to vector<2x128xbf16>
    %c256 = arith.constant 256 : index
    %c0_58 = arith.constant 0 : index
    %130 = vector.load %arg12[%c256, %c0_58] : memref<512x128xbf16, #tpu.memory_space<vmem>>, vector<128x128xbf16>
    %cst_59 = arith.constant dense<0.000000e+00> : vector<2x128xf32>
    %131 = tpu.matmul %129, %130, %cst_59 {dimension_numbers = #tpu.dot_dimension_numbers<[1], [0], [0], [1], [0, 0, 1, 1], [], []>} : vector<2x128xbf16>, vector<128x128xbf16>, vector<2x128xf32> -> vector<2x128xf32>
    %132 = arith.addf %126, %131 : vector<2x128xf32>
    %133 = vector.extract_strided_slice %113 {offsets = [0, 3, 0], sizes = [2, 1, 128], strides = [1, 1, 1]} : vector<2x4x128xf32> to vector<2x1x128xf32>
    %134 = vector.shape_cast %133 : vector<2x1x128xf32> to vector<2x128xf32>
    %135 = arith.truncf %134 : vector<2x128xf32> to vector<2x128xbf16>
    %c384 = arith.constant 384 : index
    %c0_60 = arith.constant 0 : index
    %136 = vector.load %arg12[%c384, %c0_60] : memref<512x128xbf16, #tpu.memory_space<vmem>>, vector<128x128xbf16>
    %cst_61 = arith.constant dense<0.000000e+00> : vector<2x128xf32>
    %137 = tpu.matmul %135, %136, %cst_61 {dimension_numbers = #tpu.dot_dimension_numbers<[1], [0], [0], [1], [0, 0, 1, 1], [], []>} : vector<2x128xbf16>, vector<128x128xbf16>, vector<2x128xf32> -> vector<2x128xf32>
    %138 = arith.addf %132, %137 : vector<2x128xf32>
    %c6 = arith.constant 6 : index
    %c0_62 = arith.constant 0 : index
    %139 = vector.load %arg5[%c6, %c0_62] : memref<13x128xf32, #tpu.memory_space<vmem>>, vector<1x128xf32>
    %140 = vector.broadcast %139 : vector<1x128xf32> to vector<2x128xf32>
    %141 = arith.addf %138, %140 : vector<2x128xf32>
    %cst_63 = arith.constant 0.000000e+00 : f32
    %142 = vector.broadcast %cst_63 : f32 to vector<2x128xf32>
    %143 = arith.maximumf %141, %142 : vector<2x128xf32>
    %144 = arith.truncf %143 : vector<2x128xf32> to vector<2x128xbf16>
    %c0_64 = arith.constant 0 : index
    %c0_65 = arith.constant 0 : index
    %145 = vector.load %arg13[%c0_64, %c0_65] : memref<128x128xbf16, #tpu.memory_space<vmem>>, vector<128x128xbf16>
    %cst_66 = arith.constant dense<0.000000e+00> : vector<2x128xf32>
    %146 = tpu.matmul %144, %145, %cst_66 {dimension_numbers = #tpu.dot_dimension_numbers<[1], [0], [0], [1], [0, 0, 1, 1], [], []>} : vector<2x128xbf16>, vector<128x128xbf16>, vector<2x128xf32> -> vector<2x128xf32>
    %c7 = arith.constant 7 : index
    %c0_67 = arith.constant 0 : index
    %147 = vector.load %arg5[%c7, %c0_67] : memref<13x128xf32, #tpu.memory_space<vmem>>, vector<1x128xf32>
    %148 = vector.broadcast %147 : vector<1x128xf32> to vector<2x128xf32>
    %149 = arith.addf %146, %148 : vector<2x128xf32>
    %cst_68 = arith.constant 0.000000e+00 : f32
    %150 = vector.broadcast %cst_68 : f32 to vector<2x128xf32>
    %151 = arith.maximumf %149, %150 : vector<2x128xf32>
    %c8 = arith.constant 8 : index
    %c0_69 = arith.constant 0 : index
    %152 = vector.load %arg5[%c8, %c0_69] : memref<13x128xf32, #tpu.memory_space<vmem>>, vector<1x128xf32>
    %c9 = arith.constant 9 : index
    %c0_70 = arith.constant 0 : index
    %153 = vector.load %arg5[%c9, %c0_70] : memref<13x128xf32, #tpu.memory_space<vmem>>, vector<1x128xf32>
    %cst_71 = arith.constant dense<0.000000e+00> : vector<2xf32>
    %154 = vector.multi_reduction <add>, %151, %cst_71 [1] : vector<2x128xf32> to vector<2xf32>
    %155 = vector.shape_cast %154 : vector<2xf32> to vector<2x1xf32>
    %cst_72 = arith.constant 1.280000e+02 : f32
    %156 = vector.broadcast %cst_72 : f32 to vector<2x1xf32>
    %157 = arith.divf %155, %156 : vector<2x1xf32>
    %158 = vector.broadcast %157 : vector<2x1xf32> to vector<2x128xf32>
    %159 = arith.subf %151, %158 : vector<2x128xf32>
    %160 = arith.mulf %159, %159 : vector<2x128xf32>
    %cst_73 = arith.constant dense<0.000000e+00> : vector<2xf32>
    %161 = vector.multi_reduction <add>, %160, %cst_73 [1] : vector<2x128xf32> to vector<2xf32>
    %162 = vector.shape_cast %161 : vector<2xf32> to vector<2x1xf32>
    %cst_74 = arith.constant 1.280000e+02 : f32
    %163 = vector.broadcast %cst_74 : f32 to vector<2x1xf32>
    %164 = arith.divf %162, %163 : vector<2x1xf32>
    %165 = vector.broadcast %157 : vector<2x1xf32> to vector<2x128xf32>
    %166 = arith.subf %151, %165 : vector<2x128xf32>
    %cst_75 = arith.constant 9.99999974E-6 : f32
    %167 = vector.broadcast %cst_75 : f32 to vector<2x1xf32>
    %168 = arith.addf %164, %167 : vector<2x1xf32>
    %169 = math.rsqrt %168 : vector<2x1xf32>
    %170 = vector.broadcast %169 : vector<2x1xf32> to vector<2x128xf32>
    %171 = arith.mulf %166, %170 : vector<2x128xf32>
    %172 = vector.broadcast %152 : vector<1x128xf32> to vector<2x128xf32>
    %173 = arith.mulf %171, %172 : vector<2x128xf32>
    %174 = vector.broadcast %153 : vector<1x128xf32> to vector<2x128xf32>
    %175 = arith.addf %173, %174 : vector<2x128xf32>
    %176 = arith.truncf %175 : vector<2x128xf32> to vector<2x128xbf16>
    %c0_76 = arith.constant 0 : index
    %c0_77 = arith.constant 0 : index
    %177 = vector.load %arg14[%c0_76, %c0_77] : memref<128x64xbf16, #tpu.memory_space<vmem>>, vector<128x64xbf16>
    %cst_78 = arith.constant dense<0.000000e+00> : vector<2x64xf32>
    %178 = tpu.matmul %176, %177, %cst_78 {dimension_numbers = #tpu.dot_dimension_numbers<[1], [0], [0], [1], [0, 0, 1, 1], [], []>} : vector<2x128xbf16>, vector<128x64xbf16>, vector<2x64xf32> -> vector<2x64xf32>
    %c10 = arith.constant 10 : index
    %c0_79 = arith.constant 0 : index
    %179 = vector.load %arg5[%c10, %c0_79] : memref<13x128xf32, #tpu.memory_space<vmem>>, vector<1x64xf32>
    %180 = vector.broadcast %179 : vector<1x64xf32> to vector<2x64xf32>
    %181 = arith.addf %178, %180 : vector<2x64xf32>
    %cst_80 = arith.constant 0.000000e+00 : f32
    %182 = vector.broadcast %cst_80 : f32 to vector<2x64xf32>
    %183 = arith.maximumf %181, %182 : vector<2x64xf32>
    %184 = arith.truncf %183 : vector<2x64xf32> to vector<2x64xbf16>
    %c0_81 = arith.constant 0 : index
    %c0_82 = arith.constant 0 : index
    %185 = vector.load %arg15[%c0_81, %c0_82] : memref<64x32xbf16, #tpu.memory_space<vmem>>, vector<64x32xbf16>
    %cst_83 = arith.constant dense<0.000000e+00> : vector<2x32xf32>
    %186 = tpu.matmul %184, %185, %cst_83 {dimension_numbers = #tpu.dot_dimension_numbers<[1], [0], [0], [1], [0, 0, 1, 1], [], []>} : vector<2x64xbf16>, vector<64x32xbf16>, vector<2x32xf32> -> vector<2x32xf32>
    %c11 = arith.constant 11 : index
    %c0_84 = arith.constant 0 : index
    %187 = vector.load %arg5[%c11, %c0_84] : memref<13x128xf32, #tpu.memory_space<vmem>>, vector<1x32xf32>
    %188 = vector.broadcast %187 : vector<1x32xf32> to vector<2x32xf32>
    %189 = arith.addf %186, %188 : vector<2x32xf32>
    %cst_85 = arith.constant 0.000000e+00 : f32
    %190 = vector.broadcast %cst_85 : f32 to vector<2x32xf32>
    %191 = arith.maximumf %189, %190 : vector<2x32xf32>
    %192 = arith.truncf %191 : vector<2x32xf32> to vector<2x32xbf16>
    %c0_86 = arith.constant 0 : index
    %c0_87 = arith.constant 0 : index
    %193 = vector.load %arg16[%c0_86, %c0_87] : memref<32x128xbf16, #tpu.memory_space<vmem>>, vector<32x128xbf16>
    %cst_88 = arith.constant dense<0.000000e+00> : vector<2x128xf32>
    %194 = tpu.matmul %192, %193, %cst_88 {dimension_numbers = #tpu.dot_dimension_numbers<[1], [0], [0], [1], [0, 0, 1, 1], [], []>} : vector<2x32xbf16>, vector<32x128xbf16>, vector<2x128xf32> -> vector<2x128xf32>
    %c12 = arith.constant 12 : index
    %c0_89 = arith.constant 0 : index
    %195 = vector.load %arg5[%c12, %c0_89] : memref<13x128xf32, #tpu.memory_space<vmem>>, vector<1x128xf32>
    %196 = vector.broadcast %195 : vector<1x128xf32> to vector<2x128xf32>
    %197 = arith.addf %194, %196 : vector<2x128xf32>
    %c0_90 = arith.constant 0 : index
    %c0_91 = arith.constant 0 : index
    %198 = vector.load %arg17[%c0_90, %c0_91] : memref<2x128xf32, #tpu.memory_space<vmem>>, vector<2x128xf32>
    tpu.vector_store %arg17[%c0_90, %c0_91], %197 {strides = array<i32>} : memref<2x128xf32, #tpu.memory_space<vmem>>, vector<2x128xf32>,
    return
  }
  func.func @transform_0(%arg0: i32) -> (i32, i32, i32, i32) {
    %c0_i32 = arith.constant 0 : i32
    %c0_i32_0 = arith.constant 0 : i32
    %c0_i32_1 = arith.constant 0 : i32
    %c0_i32_2 = arith.constant 0 : i32
    return %arg0, %c0_i32, %c0_i32_0, %c0_i32_1 : i32, i32, i32, i32
  }
  func.func @transform_1(%arg0: i32) -> (i32, i32, i32) {
    %c0_i32 = arith.constant 0 : i32
    %c0_i32_0 = arith.constant 0 : i32
    %c0_i32_1 = arith.constant 0 : i32
    return %arg0, %c0_i32, %c0_i32_0 : i32, i32, i32
  }
  func.func @transform_2(%arg0: i32) -> (i32, i32, i32) {
    %c0_i32 = arith.constant 0 : i32
    %c0_i32_0 = arith.constant 0 : i32
    %c0_i32_1 = arith.constant 0 : i32
    return %arg0, %c0_i32, %c0_i32_0 : i32, i32, i32
  }
  func.func @transform_3(%arg0: i32) -> (i32, i32) {
    %c0_i32 = arith.constant 0 : i32
    %c0_i32_0 = arith.constant 0 : i32
    %c0_i32_1 = arith.constant 0 : i32
    return %c0_i32, %c0_i32_0 : i32, i32
  }
  func.func @transform_4(%arg0: i32) -> (i32, i32) {
    %c0_i32 = arith.constant 0 : i32
    %c0_i32_0 = arith.constant 0 : i32
    %c0_i32_1 = arith.constant 0 : i32
    return %c0_i32, %c0_i32_0 : i32, i32
  }
  func.func @transform_5(%arg0: i32) -> (i32, i32) {
    %c0_i32 = arith.constant 0 : i32
    %c0_i32_0 = arith.constant 0 : i32
    %c0_i32_1 = arith.constant 0 : i32
    return %c0_i32, %c0_i32_0 : i32, i32
  }
  func.func @transform_6(%arg0: i32) -> (i32, i32) {
    %c0_i32 = arith.constant 0 : i32
    %c0_i32_0 = arith.constant 0 : i32
    %c0_i32_1 = arith.constant 0 : i32
    return %c0_i32, %c0_i32_0 : i32, i32
  }
  func.func @transform_7(%arg0: i32) -> (i32, i32) {
    %c0_i32 = arith.constant 0 : i32
    %c0_i32_0 = arith.constant 0 : i32
    %c0_i32_1 = arith.constant 0 : i32
    return %c0_i32, %c0_i32_0 : i32, i32
  }
  func.func @transform_8(%arg0: i32) -> (i32, i32) {
    %c0_i32 = arith.constant 0 : i32
    %c0_i32_0 = arith.constant 0 : i32
    %c0_i32_1 = arith.constant 0 : i32
    return %c0_i32, %c0_i32_0 : i32, i32
  }
  func.func @transform_9(%arg0: i32) -> (i32, i32) {
    %c0_i32 = arith.constant 0 : i32
    %c0_i32_0 = arith.constant 0 : i32
    %c0_i32_1 = arith.constant 0 : i32
    return %c0_i32, %c0_i32_0 : i32, i32
  }
  func.func @transform_10(%arg0: i32) -> (i32, i32) {
    %c0_i32 = arith.constant 0 : i32
    %c0_i32_0 = arith.constant 0 : i32
    %c0_i32_1 = arith.constant 0 : i32
    return %c0_i32, %c0_i32_0 : i32, i32
  }
  func.func @transform_11(%arg0: i32) -> (i32, i32) {
    %c0_i32 = arith.constant 0 : i32
    %c0_i32_0 = arith.constant 0 : i32
    %c0_i32_1 = arith.constant 0 : i32
    return %c0_i32, %c0_i32_0 : i32, i32
  }
  func.func @transform_12(%arg0: i32) -> (i32, i32) {
    %c0_i32 = arith.constant 0 : i32
    %c0_i32_0 = arith.constant 0 : i32
    %c0_i32_1 = arith.constant 0 : i32
    return %c0_i32, %c0_i32_0 : i32, i32
  }
  func.func @transform_13(%arg0: i32) -> (i32, i32) {
    %c0_i32 = arith.constant 0 : i32
    %c0_i32_0 = arith.constant 0 : i32
    %c0_i32_1 = arith.constant 0 : i32
    return %c0_i32, %c0_i32_0 : i32, i32
  }
  func.func @transform_14(%arg0: i32) -> (i32, i32) {
    %c0_i32 = arith.constant 0 : i32
    %c0_i32_0 = arith.constant 0 : i32
    %c0_i32_1 = arith.constant 0 : i32
    return %c0_i32, %c0_i32_0 : i32, i32
  }
  func.func @transform_15(%arg0: i32) -> (i32, i32) {
    %c0_i32 = arith.constant 0 : i32
    %c0_i32_0 = arith.constant 0 : i32
    %c0_i32_1 = arith.constant 0 : i32
    return %c0_i32, %c0_i32_0 : i32, i32
  }
  func.func @transform_16(%arg0: i32) -> (i32, i32) {
    %c0_i32 = arith.constant 0 : i32
    %c0_i32_0 = arith.constant 0 : i32
    return %arg0, %c0_i32 : i32, i32
  }
}

</mosaic_0001>

<llo_original>
// kernel: tpu_custom_call.1
$region0: #{tpu_custom_call.1}
  #allocation0 [shape = 'u32[]', space=smem, size = 0x4, offset = 0x4, fixed_abs, tag = 'smem constant byte address 0x4 - core index']
  #allocation1 [shape = 'u32[72,128]{1,0:T(1,128)}', space=vmem, size = 0x9000, scoped, tag = 'internal scratch']
  %s0 = inlined_call_operand.vmem [shape: bf16[2,8,16,10], index: 0, kind: input, shape index: {}]
  %s1 = inlined_call_operand.vmem [shape: f32[2,8,16], index: 1, kind: input, shape index: {}]
  %s2 = inlined_call_operand.vmem [shape: bf16[2,8,4], index: 2, kind: input, shape index: {}]
  %s3 = inlined_call_operand.vmem [shape: f32[8,128], index: 3, kind: input, shape index: {}]
  %s4 = inlined_call_operand.hbm [shape: f32[13,128], index: 4, kind: input, shape index: {}]
  %s5 = inlined_call_operand.hbm [shape: bf16[10,32], index: 5, kind: input, shape index: {}]
  %s6 = inlined_call_operand.hbm [shape: bf16[32,64], index: 6, kind: input, shape index: {}]
  %s7 = inlined_call_operand.vmem [shape: bf16[64,128], index: 7, kind: input, shape index: {}]
  %s8 = inlined_call_operand.hbm [shape: bf16[64,128], index: 8, kind: input, shape index: {}]
  %s9 = inlined_call_operand.hbm [shape: bf16[4,128], index: 9, kind: input, shape index: {}]
  %s10 = inlined_call_operand.vmem [shape: f32[128,4], index: 10, kind: input, shape index: {}]
  %s11 = inlined_call_operand.vmem [shape: bf16[512,128], index: 11, kind: input, shape index: {}]
  %s12 = inlined_call_operand.vmem [shape: bf16[128,128], index: 12, kind: input, shape index: {}]
  %s13 = inlined_call_operand.vmem [shape: bf16[128,64], index: 13, kind: input, shape index: {}]
  %s14 = inlined_call_operand.vmem [shape: bf16[64,32], index: 14, kind: input, shape index: {}]
  %s15 = inlined_call_operand.hbm [shape: bf16[32,128], index: 15, kind: input, shape index: {}]
  %s16 = inlined_call_operand.hbm [shape: f32[2,128], index: 16, kind: output, shape index: {}]
  %s17 = sld [smem:[#allocation0]]
  $region98: #{tpu_custom_call.1} parent=0
    _
  %s19 = ssub.s32 1, %s17
  %s20 = scalar_select 0, %s19, %s17
  $region1: #{tpu_custom_call.1} parent=0
    #allocation2 [shape = 'u8[8192]{0}', space=vmem, size = 0x2000, scoped, tag = 'input window, operand 4, single buffered']
    #allocation3 [shape = 's32[1]{0}', space=sflag, size = 0x4, scoped, tag = 'scoped memory for tpu_custom_call.1']
    #allocation4 [shape = 's32[1]{0}', space=sflag, size = 0x4, scoped, tag = 'scoped memory for tpu_custom_call.1']
    #allocation5 [shape = 'u8[4096]{0}', space=vmem, size = 0x1000, scoped, tag = 'input window, operand 5, single buffered']
    #allocation6 [shape = 's32[1]{0}', space=sflag, size = 0x4, scoped, tag = 'scoped memory for tpu_custom_call.1']
    #allocation7 [shape = 'u8[8192]{0}', space=vmem, size = 0x2000, scoped, tag = 'input window, operand 6, single buffered']
    #allocation8 [shape = 'u8[16384]{0}', space=vmem, size = 0x4000, scoped, tag = 'input window, operand 8, single buffered']
    #allocation9 [shape = 's32[1]{0}', space=sflag, size = 0x4, scoped, tag = 'scoped memory for tpu_custom_call.1']
    #allocation10 [shape = 'u8[1024]{0}', space=vmem, size = 0x400, scoped, tag = 'input window, operand 9, single buffered']
    #allocation11 [shape = 'u8[8192]{0}', space=vmem, size = 0x2000, scoped, tag = 'input window, operand 15, single buffered']
    #allocation12 [shape = 's32[1]{0}', space=sflag, size = 0x4, scoped, tag = 'scoped memory for tpu_custom_call.1']
    #allocation13 [shape = 'u8[1024]{0}', space=vmem, size = 0x400, scoped, tag = 'output window, operand 0, single buffered']
    %21 = vsyncpa [#allocation3], 0
    %22 = vsyncpa [#allocation6], 0
    %23 = vsyncpa [#allocation9], 0
    %24 = vsyncpa [#allocation12], 0
    %25 = vsyncpa [#allocation4], 0
    // Predicated region
    $region2: #{tpu_custom_call.1} parent=1 // pred_check
      _
    $region3: #{tpu_custom_call.1} parent=1 // pred_check_branch
      %27 = sbr.rel (0) target = $region5
    $region4: #{tpu_custom_call.1} parent=1 // pred_region
      _
    $region5: #{tpu_custom_call.1} parent=1 // pred_fallthru
      _
    // Predicated region
    $region6: #{tpu_custom_call.1} parent=1 // pred_check
      _
    $region7: #{tpu_custom_call.1} parent=1 // pred_check_branch
      %29 = sbr.rel (0) target = $region9
    $region8: #{tpu_custom_call.1} parent=1 // pred_region
      _
    $region9: #{tpu_custom_call.1} parent=1 // pred_fallthru
      _
    // Predicated region
    $region10: #{tpu_custom_call.1} parent=1 // pred_check
      _
    $region11: #{tpu_custom_call.1} parent=1 // pred_check_branch
      %31 = sbr.rel (0) target = $region13
    $region12: #{tpu_custom_call.1} parent=1 // pred_region
      _
    $region13: #{tpu_custom_call.1} parent=1 // pred_fallthru
      _
    // Predicated region
    $region14: #{tpu_custom_call.1} parent=1 // pred_check
      _
    $region15: #{tpu_custom_call.1} parent=1 // pred_check_branch
      %33 = sbr.rel (0) target = $region17
    $region16: #{tpu_custom_call.1} parent=1 // pred_region
      _
    $region17: #{tpu_custom_call.1} parent=1 // pred_fallthru
      _
    // Predicated region
    $region18: #{tpu_custom_call.1} parent=1 // pred_check
      _
    $region19: #{tpu_custom_call.1} parent=1 // pred_check_branch
      %35 = sbr.rel (0) target = $region21
    $region20: #{tpu_custom_call.1} parent=1 // pred_region
      %37 = vsyncadd [#allocation3], 0
      %s38 = sshll.u32 %s4, 4
      %s39 = int_to_ptr.hbm [resolvable:$true] %s38
      %s40 = sshll.u32 [#allocation2], 4
      %s41 = int_to_ptr.vmem [resolvable:$true] %s40
      %46 = dma.hbm_to_vmem [thread:$0]  %s39, 256, %s41, [#allocation3], 128, 128, 8
    $region21: #{tpu_custom_call.1} parent=1 // pred_fallthru
      _
    // Predicated region
    $region22: #{tpu_custom_call.1} parent=1 // pred_check
      _
    $region23: #{tpu_custom_call.1} parent=1 // pred_check_branch
      %48 = sbr.rel (0) target = $region25
    $region24: #{tpu_custom_call.1} parent=1 // pred_region
      %50 = vsyncadd [#allocation6], 0
      %s51 = sshll.u32 %s5, 4
      %s52 = int_to_ptr.hbm [resolvable:$true] %s51
      %s53 = sshll.u32 [#allocation5], 4
      %s54 = int_to_ptr.vmem [resolvable:$true] %s53
      %59 = dma.hbm_to_vmem [thread:$0]  %s52, 128, %s54, [#allocation6], 64, 64, 4
    $region25: #{tpu_custom_call.1} parent=1 // pred_fallthru
      _
    // Predicated region
    $region26: #{tpu_custom_call.1} parent=1 // pred_check
      _
    $region27: #{tpu_custom_call.1} parent=1 // pred_check_branch
      %61 = sbr.rel (0) target = $region29
    $region28: #{tpu_custom_call.1} parent=1 // pred_region
      %63 = vsyncadd [#allocation6], 0
      %s64 = sshll.u32 %s6, 4
      %s65 = int_to_ptr.hbm [resolvable:$true] %s64
      %s66 = sshll.u32 [#allocation7], 4
      %s67 = int_to_ptr.vmem [resolvable:$true] %s66
      %72 = dma.hbm_to_vmem [thread:$0]  %s65, 256, %s67, [#allocation6], 64, 64, 4
    $region29: #{tpu_custom_call.1} parent=1 // pred_fallthru
      _
    // Predicated region
    $region30: #{tpu_custom_call.1} parent=1 // pred_check
      _
    $region31: #{tpu_custom_call.1} parent=1 // pred_check_branch
      %74 = sbr.rel (0) target = $region33
    $region32: #{tpu_custom_call.1} parent=1 // pred_region
      _
    $region33: #{tpu_custom_call.1} parent=1 // pred_fallthru
      _
    // Predicated region
    $region34: #{tpu_custom_call.1} parent=1 // pred_check
      _
    $region35: #{tpu_custom_call.1} parent=1 // pred_check_branch
      %76 = sbr.rel (0) target = $region37
    $region36: #{tpu_custom_call.1} parent=1 // pred_region
      %78 = vsyncadd [#allocation9], 0
      %s79 = sshll.u32 %s8, 4
      %s80 = int_to_ptr.hbm [resolvable:$true] %s79
      %s81 = sshll.u32 [#allocation8], 4
      %s82 = int_to_ptr.vmem [resolvable:$true] %s81
      %87 = dma.hbm_to_vmem [thread:$0]  %s80, 512, %s82, [#allocation9], 64, 64, 4
    $region37: #{tpu_custom_call.1} parent=1 // pred_fallthru
      _
    // Predicated region
    $region38: #{tpu_custom_call.1} parent=1 // pred_check
      _
    $region39: #{tpu_custom_call.1} parent=1 // pred_check_branch
      %89 = sbr.rel (0) target = $region41
    $region40: #{tpu_custom_call.1} parent=1 // pred_region
      %91 = vsyncadd [#allocation9], 0
      %s93 = sshll.u32 %s9, 4
      %s94 = int_to_ptr.hbm [resolvable:$true] %s93
      %s95 = sshll.u32 [#allocation10], 4
      %s96 = int_to_ptr.vmem [resolvable:$true] %s95
      %98 = dma.hbm_to_vmem [thread:$0]  %s94, 32, %s96, [#allocation9]
    $region41: #{tpu_custom_call.1} parent=1 // pred_fallthru
      _
    // Predicated region
    $region42: #{tpu_custom_call.1} parent=1 // pred_check
      _
    $region43: #{tpu_custom_call.1} parent=1 // pred_check_branch
      %100 = sbr.rel (0) target = $region45
    $region44: #{tpu_custom_call.1} parent=1 // pred_region
      _
    $region45: #{tpu_custom_call.1} parent=1 // pred_fallthru
      _
    // Predicated region
    $region46: #{tpu_custom_call.1} parent=1 // pred_check
      _
    $region47: #{tpu_custom_call.1} parent=1 // pred_check_branch
      %102 = sbr.rel (0) target = $region49
    $region48: #{tpu_custom_call.1} parent=1 // pred_region
      _
    $region49: #{tpu_custom_call.1} parent=1 // pred_fallthru
      _
    // Predicated region
    $region50: #{tpu_custom_call.1} parent=1 // pred_check
      _
    $region51: #{tpu_custom_call.1} parent=1 // pred_check_branch
      %104 = sbr.rel (0) target = $region53
    $region52: #{tpu_custom_call.1} parent=1 // pred_region
      _
    $region53: #{tpu_custom_call.1} parent=1 // pred_fallthru
      _
    // Predicated region
    $region54: #{tpu_custom_call.1} parent=1 // pred_check
      _
    $region55: #{tpu_custom_call.1} parent=1 // pred_check_branch
      %106 = sbr.rel (0) target = $region57
    $region56: #{tpu_custom_call.1} parent=1 // pred_region
      _
    $region57: #{tpu_custom_call.1} parent=1 // pred_fallthru
      _
    // Predicated region
    $region58: #{tpu_custom_call.1} parent=1 // pred_check
      _
    $region59: #{tpu_custom_call.1} parent=1 // pred_check_branch
      %108 = sbr.rel (0) target = $region61
    $region60: #{tpu_custom_call.1} parent=1 // pred_region
      _
    $region61: #{tpu_custom_call.1} parent=1 // pred_fallthru
      _
    // Predicated region
    $region62: #{tpu_custom_call.1} parent=1 // pred_check
      _
    $region63: #{tpu_custom_call.1} parent=1 // pred_check_branch
      %110 = sbr.rel (0) target = $region65
    $region64: #{tpu_custom_call.1} parent=1 // pred_region
      %112 = vsyncadd [#allocation12], 0
      %s113 = sshll.u32 %s15, 4
      %s114 = int_to_ptr.hbm [resolvable:$true] %s113
      %s115 = sshll.u32 [#allocation11], 4
      %s116 = int_to_ptr.vmem [resolvable:$true] %s115
      %121 = dma.hbm_to_vmem [thread:$0]  %s114, 256, %s116, [#allocation12], 64, 64, 4
    $region65: #{tpu_custom_call.1} parent=1 // pred_fallthru
      _
    // Predicated region
    $region66: #{tpu_custom_call.1} parent=1 // pred_check
      _
    $region67: #{tpu_custom_call.1} parent=1 // pred_check_branch
      %123 = sbr.rel (0) target = $region69
    $region68: #{tpu_custom_call.1} parent=1 // pred_region
      %125 = dma.done [#allocation3], 256
    $region69: #{tpu_custom_call.1} parent=1 // pred_fallthru
      _
    // Predicated region
    $region70: #{tpu_custom_call.1} parent=1 // pred_check
      _
    $region71: #{tpu_custom_call.1} parent=1 // pred_check_branch
      %127 = sbr.rel (0) target = $region73
    $region72: #{tpu_custom_call.1} parent=1 // pred_region
      %129 = dma.done [#allocation6], 128
    $region73: #{tpu_custom_call.1} parent=1 // pred_fallthru
      _
    // Predicated region
    $region74: #{tpu_custom_call.1} parent=1 // pred_check
      _
    $region75: #{tpu_custom_call.1} parent=1 // pred_check_branch
      %131 = sbr.rel (0) target = $region77
    $region76: #{tpu_custom_call.1} parent=1 // pred_region
      %133 = dma.done [#allocation6], 256
    $region77: #{tpu_custom_call.1} parent=1 // pred_fallthru
      _
    // Predicated region
    $region78: #{tpu_custom_call.1} parent=1 // pred_check
      _
    $region79: #{tpu_custom_call.1} parent=1 // pred_check_branch
      %135 = sbr.rel (0) target = $region81
    $region80: #{tpu_custom_call.1} parent=1 // pred_region
      %137 = dma.done [#allocation9], 512
    $region81: #{tpu_custom_call.1} parent=1 // pred_fallthru
      _
    // Predicated region
    $region82: #{tpu_custom_call.1} parent=1 // pred_check
      _
    $region83: #{tpu_custom_call.1} parent=1 // pred_check_branch
      %139 = sbr.rel (0) target = $region85
    $region84: #{tpu_custom_call.1} parent=1 // pred_region
      %141 = dma.done [#allocation9], 32
    $region85: #{tpu_custom_call.1} parent=1 // pred_fallthru
      _
    // Predicated region
    $region86: #{tpu_custom_call.1} parent=1 // pred_check
      _
    $region87: #{tpu_custom_call.1} parent=1 // pred_check_branch
      %143 = sbr.rel (0) target = $region89
    $region88: #{tpu_custom_call.1} parent=1 // pred_region
      %145 = dma.done [#allocation12], 256
    $region89: #{tpu_custom_call.1} parent=1 // pred_fallthru
      _
    %v147 = vld [vmem:[%s0] sm:$0xf]
    %v148 = vld [vmem:[%s0 + $0x4] sm:$0xf]
    %v149 = vld [vmem:[%s0 + $0x8] sm:$0xf]
    %v150 = vld [vmem:[%s0 + $0xc] sm:$0xf]
    %v151 = vld [vmem:[%s0 + $0x10] sm:$0xf]
    %v152 = vld [vmem:[%s0 + $0x14] sm:$0xf]
    %v153 = vld [vmem:[%s0 + $0x18] sm:$0xf]
    %v154 = vld [vmem:[%s0 + $0x1c] sm:$0xf]
    %v155 = vld [vmem:[%s0 + $0x20] sm:$0xf]
    %v156 = vld [vmem:[%s0 + $0x24] sm:$0xf]
    %v157 = vld [vmem:[%s0 + $0x28] sm:$0xf]
    %v158 = vld [vmem:[%s0 + $0x2c] sm:$0xf]
    %v159 = vld [vmem:[%s0 + $0x30] sm:$0xf]
    %v160 = vld [vmem:[%s0 + $0x34] sm:$0xf]
    %v161 = vld [vmem:[%s0 + $0x38] sm:$0xf]
    %v162 = vld [vmem:[%s0 + $0x3c] sm:$0xf]
    %v163 = vld [vmem:[%s0 + $0x40] sm:$0xf]
    %v164 = vld [vmem:[%s0 + $0x44] sm:$0xf]
    %v165 = vld [vmem:[%s0 + $0x48] sm:$0xf]
    %v166 = vld [vmem:[%s0 + $0x4c] sm:$0xf]
    %v167 = vld [vmem:[%s0 + $0x50] sm:$0xf]
    %v168 = vld [vmem:[%s0 + $0x54] sm:$0xf]
    %v169 = vld [vmem:[%s0 + $0x58] sm:$0xf]
    %v170 = vld [vmem:[%s0 + $0x5c] sm:$0xf]
    %v171 = vld [vmem:[%s0 + $0x60] sm:$0xf]
    %v172 = vld [vmem:[%s0 + $0x64] sm:$0xf]
    %v173 = vld [vmem:[%s0 + $0x68] sm:$0xf]
    %v174 = vld [vmem:[%s0 + $0x6c] sm:$0xf]
    %v175 = vld [vmem:[%s0 + $0x70] sm:$0xf]
    %v176 = vld [vmem:[%s0 + $0x74] sm:$0xf]
    %v177 = vld [vmem:[%s0 + $0x78] sm:$0xf]
    %v178 = vld [vmem:[%s0 + $0x7c] sm:$0xf]
    %v179 = vld [vmem:[#allocation5] sm:$0xf]
    %v180 = vld [vmem:[#allocation5 + $0x4] sm:$0x1]
    %v181 = vld [vmem:[#allocation2] sm:$0x1]
    %v182 = vperm.slane %v181, 0
    %v215 = vunpack.c.l.b16 %v147
    %v216 = vunpack.c.l.b16 %v148
    %v217 = vunpack.c.l.b16 %v149
    %v218 = vunpack.c.l.b16 %v150
    %v219 = vunpack.c.l.b16 %v151
    %v220 = vunpack.c.l.b16 %v152
    %v221 = vunpack.c.l.b16 %v153
    %v222 = vunpack.c.l.b16 %v154
    %v223 = vunpack.c.l.b16 %v155
    %v224 = vunpack.c.l.b16 %v156
    %v225 = vunpack.c.l.b16 %v157
    %v226 = vunpack.c.l.b16 %v158
    %v227 = vunpack.c.l.b16 %v159
    %v228 = vunpack.c.l.b16 %v160
    %v229 = vunpack.c.l.b16 %v161
    %v230 = vunpack.c.l.b16 %v162
    %v231 = vunpack.c.l.b16 %v163
    %v232 = vunpack.c.l.b16 %v164
    %v233 = vunpack.c.l.b16 %v165
    %v234 = vunpack.c.l.b16 %v166
    %v235 = vunpack.c.l.b16 %v167
    %v236 = vunpack.c.l.b16 %v168
    %v237 = vunpack.c.l.b16 %v169
    %v238 = vunpack.c.l.b16 %v170
    %v239 = vunpack.c.l.b16 %v171
    %v240 = vunpack.c.l.b16 %v172
    %v241 = vunpack.c.l.b16 %v173
    %v242 = vunpack.c.l.b16 %v174
    %v243 = vunpack.c.l.b16 %v175
    %v244 = vunpack.c.l.b16 %v176
    %v245 = vunpack.c.l.b16 %v177
    %v246 = vunpack.c.l.b16 %v178
    %v247 = vpack.c.b16 %v216, %v215
    %v248 = vpack.c.b16 %v218, %v217
    %v249 = vpack.c.b16 %v220, %v219
    %v250 = vpack.c.b16 %v222, %v221
    %v251 = vpack.c.b16 %v224, %v223
    %v252 = vpack.c.b16 %v226, %v225
    %v253 = vpack.c.b16 %v228, %v227
    %v254 = vpack.c.b16 %v230, %v229
    %v255 = vpack.c.b16 %v232, %v231
    %v256 = vpack.c.b16 %v234, %v233
    %v257 = vpack.c.b16 %v236, %v235
    %v258 = vpack.c.b16 %v238, %v237
    %v259 = vpack.c.b16 %v240, %v239
    %v260 = vpack.c.b16 %v242, %v241
    %v261 = vpack.c.b16 %v244, %v243
    %v262 = vpack.c.b16 %v246, %v245
    %v265 = vunpack.c.l.b16 %v179
    %v266 = vunpack.c.l.b16 %v180
    %v267 = vpack.c.b16 %v266, %v265
    %vm268 = vcmask 80896
    %v270 = vsel %vm268, %v247, 0
    %v273 = vsel %vm268, %v248, 0
    %v276 = vsel %vm268, %v249, 0
    %v279 = vsel %vm268, %v250, 0
    %v282 = vsel %vm268, %v251, 0
    %v285 = vsel %vm268, %v252, 0
    %v288 = vsel %vm268, %v253, 0
    %v291 = vsel %vm268, %v254, 0
    %v294 = vsel %vm268, %v255, 0
    %v297 = vsel %vm268, %v256, 0
    %v300 = vsel %vm268, %v257, 0
    %v303 = vsel %vm268, %v258, 0
    %v306 = vsel %vm268, %v259, 0
    %v309 = vsel %vm268, %v260, 0
    %v312 = vsel %vm268, %v261, 0
    %v315 = vsel %vm268, %v262, 0
    %vm317 = vcmask 1044480
    %v319 = vsel %vm317, %v267, 0
    %321 = vmatpush.bf16.msra.mxu0 0
    %322 = vmatpush.bf16.msra.mxu0 0
    %323 = vmatpush.bf16.msra.mxu0 0
    %324 = vmatpush.bf16.msra.mxu0 0
    %325 = vmatpush.bf16.msra.mxu0 0
    %326 = vmatpush.bf16.msra.mxu0 0
    %327 = vmatpush.bf16.msra.mxu0 0
    %328 = vmatpush.bf16.msra.mxu0 %v319
    %329 = vmatmul.bf16.gmra.mxu0 %v270
    %v330 = vpop.f32.mrf.mxu0
    %v331 = vadd.f32 %v182, %v330
    %v332 = vpop.f32.mrf.mxu0
    %v333 = vadd.f32 %v182, %v332
    %334 = vmatmul.bf16.gmra.mxu0 %v273
    %v335 = vpop.f32.mrf.mxu0
    %v336 = vadd.f32 %v182, %v335
    %v337 = vpop.f32.mrf.mxu0
    %v338 = vadd.f32 %v182, %v337
    %339 = vmatmul.bf16.gmra.mxu0 %v276
    %v340 = vpop.f32.mrf.mxu0
    %v341 = vadd.f32 %v182, %v340
    %v342 = vpop.f32.mrf.mxu0
    %v343 = vadd.f32 %v182, %v342
    %344 = vmatmul.bf16.gmra.mxu0 %v279
    %v345 = vpop.f32.mrf.mxu0
    %v346 = vadd.f32 %v182, %v345
    %v347 = vpop.f32.mrf.mxu0
    %v348 = vadd.f32 %v182, %v347
    %349 = vmatmul.bf16.gmra.mxu0 %v282
    %v350 = vpop.f32.mrf.mxu0
    %v351 = vadd.f32 %v182, %v350
    %v352 = vpop.f32.mrf.mxu0
    %v353 = vadd.f32 %v182, %v352
    %354 = vmatmul.bf16.gmra.mxu0 %v285
    %v355 = vpop.f32.mrf.mxu0
    %v356 = vadd.f32 %v182, %v355
    %v357 = vpop.f32.mrf.mxu0
    %v358 = vadd.f32 %v182, %v357
    %359 = vmatmul.bf16.gmra.mxu0 %v288
    %v360 = vpop.f32.mrf.mxu0
    %v361 = vadd.f32 %v182, %v360
    %v362 = vpop.f32.mrf.mxu0
    %v363 = vadd.f32 %v182, %v362
    %364 = vmatmul.bf16.gmra.mxu0 %v291
    %v365 = vpop.f32.mrf.mxu0
    %v366 = vadd.f32 %v182, %v365
    %v367 = vpop.f32.mrf.mxu0
    %v368 = vadd.f32 %v182, %v367
    %369 = vmatmul.bf16.gmra.mxu0 %v294
    %v370 = vpop.f32.mrf.mxu0
    %v371 = vadd.f32 %v182, %v370
    %v372 = vpop.f32.mrf.mxu0
    %v373 = vadd.f32 %v182, %v372
    %374 = vmatmul.bf16.gmra.mxu0 %v297
    %v375 = vpop.f32.mrf.mxu0
    %v376 = vadd.f32 %v182, %v375
    %v377 = vpop.f32.mrf.mxu0
    %v378 = vadd.f32 %v182, %v377
    %379 = vmatmul.bf16.gmra.mxu0 %v300
    %v380 = vpop.f32.mrf.mxu0
    %v381 = vadd.f32 %v182, %v380
    %v382 = vpop.f32.mrf.mxu0
    %v383 = vadd.f32 %v182, %v382
    %384 = vmatmul.bf16.gmra.mxu0 %v303
    %v385 = vpop.f32.mrf.mxu0
    %v386 = vadd.f32 %v182, %v385
    %v387 = vpop.f32.mrf.mxu0
    %v388 = vadd.f32 %v182, %v387
    %389 = vmatmul.bf16.gmra.mxu0 %v306
    %v390 = vpop.f32.mrf.mxu0
    %v391 = vadd.f32 %v182, %v390
    %v392 = vpop.f32.mrf.mxu0
    %v393 = vadd.f32 %v182, %v392
    %394 = vmatmul.bf16.gmra.mxu0 %v309
    %v395 = vpop.f32.mrf.mxu0
    %v396 = vadd.f32 %v182, %v395
    %v397 = vpop.f32.mrf.mxu0
    %v398 = vadd.f32 %v182, %v397
    %399 = vmatmul.bf16.gmra.mxu0 %v312
    %v400 = vpop.f32.mrf.mxu0
    %v401 = vadd.f32 %v182, %v400
    %v402 = vpop.f32.mrf.mxu0
    %v403 = vadd.f32 %v182, %v402
    %404 = vmatmul.bf16.gmra.mxu0 %v315
    %v405 = vpop.f32.mrf.mxu0
    %v406 = vadd.f32 %v182, %v405
    %v407 = vpop.f32.mrf.mxu0
    %v408 = vadd.f32 %v182, %v407
    %409 = vdwg.mxu0
    %v410 = vmax.f32 %v331, 0.0
    %v411 = vmax.f32 %v333, 0.0
    %v412 = vmax.f32 %v336, 0.0
    %v413 = vmax.f32 %v338, 0.0
    %v414 = vmax.f32 %v341, 0.0
    %v415 = vmax.f32 %v343, 0.0
    %v416 = vmax.f32 %v346, 0.0
    %v417 = vmax.f32 %v348, 0.0
    %v418 = vmax.f32 %v351, 0.0
    %v419 = vmax.f32 %v353, 0.0
    %v420 = vmax.f32 %v356, 0.0
    %v421 = vmax.f32 %v358, 0.0
    %v422 = vmax.f32 %v361, 0.0
    %v423 = vmax.f32 %v363, 0.0
    %v424 = vmax.f32 %v366, 0.0
    %v425 = vmax.f32 %v368, 0.0
    %v426 = vmax.f32 %v371, 0.0
    %v427 = vmax.f32 %v373, 0.0
    %v428 = vmax.f32 %v376, 0.0
    %v429 = vmax.f32 %v378, 0.0
    %v430 = vmax.f32 %v381, 0.0
    %v431 = vmax.f32 %v383, 0.0
    %v432 = vmax.f32 %v386, 0.0
    %v433 = vmax.f32 %v388, 0.0
    %v434 = vmax.f32 %v391, 0.0
    %v435 = vmax.f32 %v393, 0.0
    %v436 = vmax.f32 %v396, 0.0
    %v437 = vmax.f32 %v398, 0.0
    %v438 = vmax.f32 %v401, 0.0
    %v439 = vmax.f32 %v403, 0.0
    %v440 = vmax.f32 %v406, 0.0
    %v441 = vmax.f32 %v408, 0.0
    %v442 = vpack.c.bf16 %v411, %v410
    %v443 = vpack.c.bf16 %v413, %v412
    %v444 = vpack.c.bf16 %v415, %v414
    %v445 = vpack.c.bf16 %v417, %v416
    %v446 = vpack.c.bf16 %v419, %v418
    %v447 = vpack.c.bf16 %v421, %v420
    %v448 = vpack.c.bf16 %v423, %v422
    %v449 = vpack.c.bf16 %v425, %v424
    %v450 = vpack.c.bf16 %v427, %v426
    %v451 = vpack.c.bf16 %v429, %v428
    %v452 = vpack.c.bf16 %v431, %v430
    %v453 = vpack.c.bf16 %v433, %v432
    %v454 = vpack.c.bf16 %v435, %v434
    %v455 = vpack.c.bf16 %v437, %v436
    %v456 = vpack.c.bf16 %v439, %v438
    %v457 = vpack.c.bf16 %v441, %v440
    %v458 = vld [vmem:[#allocation7] sm:$0xf]
    %v459 = vld [vmem:[#allocation7 + $0x4] sm:$0xf]
    %v460 = vld [vmem:[#allocation7 + $0x8] sm:$0xf]
    %v461 = vld [vmem:[#allocation7 + $0xc] sm:$0xf]
    %v462 = vld [vmem:[#allocation2 + $0x1] sm:$0x1]
    %v463 = vperm.slane %v462, 0
    %v468 = vunpack.c.l.b16 %v458
    %v469 = vunpack.c.l.b16 %v459
    %v470 = vunpack.c.l.b16 %v460
    %v471 = vunpack.c.l.b16 %v461
    %v472 = vpack.c.b16 %v469, %v468
    %v473 = vpack.c.b16 %v471, %v470
    %vm476 = vcmask 261120
    %v478 = vsel %vm476, %v442, 0
    %v481 = vsel %vm476, %v443, 0
    %v484 = vsel %vm476, %v444, 0
    %v487 = vsel %vm476, %v445, 0
    %v490 = vsel %vm476, %v446, 0
    %v493 = vsel %vm476, %v447, 0
    %v496 = vsel %vm476, %v448, 0
    %v499 = vsel %vm476, %v449, 0
    %v502 = vsel %vm476, %v450, 0
    %v505 = vsel %vm476, %v451, 0
    %v508 = vsel %vm476, %v452, 0
    %v511 = vsel %vm476, %v453, 0
    %v514 = vsel %vm476, %v454, 0
    %v517 = vsel %vm476, %v455, 0
    %v520 = vsel %vm476, %v456, 0
    %v523 = vsel %vm476, %v457, 0
    %525 = vmatpush.bf16.msra.mxu0 0
    %526 = vmatpush.bf16.msra.mxu0 0
    %527 = vmatpush.bf16.msra.mxu0 0
    %528 = vmatpush.bf16.msra.mxu0 0
    %529 = vmatpush.bf16.msra.mxu0 0
    %530 = vmatpush.bf16.msra.mxu0 0
    %531 = vmatpush.bf16.msra.mxu0 %v473
    %532 = vmatpush.bf16.msra.mxu0 %v472
    %533 = vmatmul.bf16.gmra.mxu0 %v478
    %v534 = vpop.f32.mrf.mxu0
    %v535 = vadd.f32 %v463, %v534
    %v536 = vpop.f32.mrf.mxu0
    %v537 = vadd.f32 %v463, %v536
    %538 = vmatmul.bf16.gmra.mxu0 %v481
    %v539 = vpop.f32.mrf.mxu0
    %v540 = vadd.f32 %v463, %v539
    %v541 = vpop.f32.mrf.mxu0
    %v542 = vadd.f32 %v463, %v541
    %543 = vmatmul.bf16.gmra.mxu0 %v484
    %v544 = vpop.f32.mrf.mxu0
    %v545 = vadd.f32 %v463, %v544
    %v546 = vpop.f32.mrf.mxu0
    %v547 = vadd.f32 %v463, %v546
    %548 = vmatmul.bf16.gmra.mxu0 %v487
    %v549 = vpop.f32.mrf.mxu0
    %v550 = vadd.f32 %v463, %v549
    %v551 = vpop.f32.mrf.mxu0
    %v552 = vadd.f32 %v463, %v551
    %553 = vmatmul.bf16.gmra.mxu0 %v490
    %v554 = vpop.f32.mrf.mxu0
    %v555 = vadd.f32 %v463, %v554
    %v556 = vpop.f32.mrf.mxu0
    %v557 = vadd.f32 %v463, %v556
    %558 = vmatmul.bf16.gmra.mxu0 %v493
    %v559 = vpop.f32.mrf.mxu0
    %v560 = vadd.f32 %v463, %v559
    %v561 = vpop.f32.mrf.mxu0
    %v562 = vadd.f32 %v463, %v561
    %563 = vmatmul.bf16.gmra.mxu0 %v496
    %v564 = vpop.f32.mrf.mxu0
    %v565 = vadd.f32 %v463, %v564
    %v566 = vpop.f32.mrf.mxu0
    %v567 = vadd.f32 %v463, %v566
    %568 = vmatmul.bf16.gmra.mxu0 %v499
    %v569 = vpop.f32.mrf.mxu0
    %v570 = vadd.f32 %v463, %v569
    %v571 = vpop.f32.mrf.mxu0
    %v572 = vadd.f32 %v463, %v571
    %573 = vmatmul.bf16.gmra.mxu0 %v502
    %v574 = vpop.f32.mrf.mxu0
    %v575 = vadd.f32 %v463, %v574
    %v576 = vpop.f32.mrf.mxu0
    %v577 = vadd.f32 %v463, %v576
    %578 = vmatmul.bf16.gmra.mxu0 %v505
    %v579 = vpop.f32.mrf.mxu0
    %v580 = vadd.f32 %v463, %v579
    %v581 = vpop.f32.mrf.mxu0
    %v582 = vadd.f32 %v463, %v581
    %583 = vmatmul.bf16.gmra.mxu0 %v508
    %v584 = vpop.f32.mrf.mxu0
    %v585 = vadd.f32 %v463, %v584
    %v586 = vpop.f32.mrf.mxu0
    %v587 = vadd.f32 %v463, %v586
    %588 = vmatmul.bf16.gmra.mxu0 %v511
    %v589 = vpop.f32.mrf.mxu0
    %v590 = vadd.f32 %v463, %v589
    %v591 = vpop.f32.mrf.mxu0
    %v592 = vadd.f32 %v463, %v591
    %593 = vmatmul.bf16.gmra.mxu0 %v514
    %v594 = vpop.f32.mrf.mxu0
    %v595 = vadd.f32 %v463, %v594
    %v596 = vpop.f32.mrf.mxu0
    %v597 = vadd.f32 %v463, %v596
    %598 = vmatmul.bf16.gmra.mxu0 %v517
    %v599 = vpop.f32.mrf.mxu0
    %v600 = vadd.f32 %v463, %v599
    %v601 = vpop.f32.mrf.mxu0
    %v602 = vadd.f32 %v463, %v601
    %603 = vmatmul.bf16.gmra.mxu0 %v520
    %v604 = vpop.f32.mrf.mxu0
    %v605 = vadd.f32 %v463, %v604
    %v606 = vpop.f32.mrf.mxu0
    %v607 = vadd.f32 %v463, %v606
    %608 = vmatmul.bf16.gmra.mxu0 %v523
    %v609 = vpop.f32.mrf.mxu0
    %v610 = vadd.f32 %v463, %v609
    %v611 = vpop.f32.mrf.mxu0
    %v612 = vadd.f32 %v463, %v611
    %613 = vdwg.mxu0
    %v614 = vmax.f32 %v535, 0.0
    %v615 = vmax.f32 %v537, 0.0
    %v616 = vmax.f32 %v540, 0.0
    %v617 = vmax.f32 %v542, 0.0
    %v618 = vmax.f32 %v545, 0.0
    %v619 = vmax.f32 %v547, 0.0
    %v620 = vmax.f32 %v550, 0.0
    %v621 = vmax.f32 %v552, 0.0
    %v622 = vmax.f32 %v555, 0.0
    %v623 = vmax.f32 %v557, 0.0
    %v624 = vmax.f32 %v560, 0.0
    %v625 = vmax.f32 %v562, 0.0
    %v626 = vmax.f32 %v565, 0.0
    %v627 = vmax.f32 %v567, 0.0
    %v628 = vmax.f32 %v570, 0.0
    %v629 = vmax.f32 %v572, 0.0
    %v630 = vmax.f32 %v575, 0.0
    %v631 = vmax.f32 %v577, 0.0
    %v632 = vmax.f32 %v580, 0.0
    %v633 = vmax.f32 %v582, 0.0
    %v634 = vmax.f32 %v585, 0.0
    %v635 = vmax.f32 %v587, 0.0
    %v636 = vmax.f32 %v590, 0.0
    %v637 = vmax.f32 %v592, 0.0
    %v638 = vmax.f32 %v595, 0.0
    %v639 = vmax.f32 %v597, 0.0
    %v640 = vmax.f32 %v600, 0.0
    %v641 = vmax.f32 %v602, 0.0
    %v642 = vmax.f32 %v605, 0.0
    %v643 = vmax.f32 %v607, 0.0
    %v644 = vmax.f32 %v610, 0.0
    %v645 = vmax.f32 %v612, 0.0
    %v646 = vld [vmem:[%s1] sm:$0xff]
    %v647 = vld [vmem:[%s1 + $0x8] sm:$0xff]
    %v648 = vperm.slane %v646, 0
    %v649 = vlaneseq
    %v650 = vshrl.u32 %v649, 7
    %652 = vset.pattern.permute.xlu0 %v650
    %653 = vperm.xlu0 %652, %v648
    %v654 = vpop.permute.xlu0 %653
    %v655 = vlaneseq
    %v656 = vshrl.u32 %v655, 7
    %v657 = vadd.s32 %v656, 8
    %658 = vset.pattern.permute.xlu0 %v657
    %659 = vperm.xlu0 %658, %v648
    %v660 = vpop.permute.xlu0 %659
    %v661 = vperm.slane %v646, 1
    %v662 = vlaneseq
    %v663 = vshrl.u32 %v662, 7
    %665 = vset.pattern.permute.xlu0 %v663
    %666 = vperm.xlu0 %665, %v661
    %v667 = vpop.permute.xlu0 %666
    %v668 = vlaneseq
    %v669 = vshrl.u32 %v668, 7
    %v670 = vadd.s32 %v669, 8
    %671 = vset.pattern.permute.xlu0 %v670
    %672 = vperm.xlu0 %671, %v661
    %v673 = vpop.permute.xlu0 %672
    %v674 = vperm.slane %v646, 2
    %v675 = vlaneseq
    %v676 = vshrl.u32 %v675, 7
    %678 = vset.pattern.permute.xlu0 %v676
    %679 = vperm.xlu0 %678, %v674
    %v680 = vpop.permute.xlu0 %679
    %v681 = vlaneseq
    %v682 = vshrl.u32 %v681, 7
    %v683 = vadd.s32 %v682, 8
    %684 = vset.pattern.permute.xlu0 %v683
    %685 = vperm.xlu0 %684, %v674
    %v686 = vpop.permute.xlu0 %685
    %v687 = vperm.slane %v646, 3
    %v688 = vlaneseq
    %v689 = vshrl.u32 %v688, 7
    %691 = vset.pattern.permute.xlu0 %v689
    %692 = vperm.xlu0 %691, %v687
    %v693 = vpop.permute.xlu0 %692
    %v694 = vlaneseq
    %v695 = vshrl.u32 %v694, 7
    %v696 = vadd.s32 %v695, 8
    %697 = vset.pattern.permute.xlu0 %v696
    %698 = vperm.xlu0 %697, %v687
    %v699 = vpop.permute.xlu0 %698
    %v700 = vperm.slane %v646, 4
    %v701 = vlaneseq
    %v702 = vshrl.u32 %v701, 7
    %704 = vset.pattern.permute.xlu0 %v702
    %705 = vperm.xlu0 %704, %v700
    %v706 = vpop.permute.xlu0 %705
    %v707 = vlaneseq
    %v708 = vshrl.u32 %v707, 7
    %v709 = vadd.s32 %v708, 8
    %710 = vset.pattern.permute.xlu0 %v709
    %711 = vperm.xlu0 %710, %v700
    %v712 = vpop.permute.xlu0 %711
    %v713 = vperm.slane %v646, 5
    %v714 = vlaneseq
    %v715 = vshrl.u32 %v714, 7
    %717 = vset.pattern.permute.xlu0 %v715
    %718 = vperm.xlu0 %717, %v713
    %v719 = vpop.permute.xlu0 %718
    %v720 = vlaneseq
    %v721 = vshrl.u32 %v720, 7
    %v722 = vadd.s32 %v721, 8
    %723 = vset.pattern.permute.xlu0 %v722
    %724 = vperm.xlu0 %723, %v713
    %v725 = vpop.permute.xlu0 %724
    %v726 = vperm.slane %v646, 6
    %v727 = vlaneseq
    %v728 = vshrl.u32 %v727, 7
    %730 = vset.pattern.permute.xlu0 %v728
    %731 = vperm.xlu0 %730, %v726
    %v732 = vpop.permute.xlu0 %731
    %v733 = vlaneseq
    %v734 = vshrl.u32 %v733, 7
    %v735 = vadd.s32 %v734, 8
    %736 = vset.pattern.permute.xlu0 %v735
    %737 = vperm.xlu0 %736, %v726
    %v738 = vpop.permute.xlu0 %737
    %v739 = vperm.slane %v646, 7
    %v740 = vlaneseq
    %v741 = vshrl.u32 %v740, 7
    %743 = vset.pattern.permute.xlu0 %v741
    %744 = vperm.xlu0 %743, %v739
    %v745 = vpop.permute.xlu0 %744
    %v746 = vlaneseq
    %v747 = vshrl.u32 %v746, 7
    %v748 = vadd.s32 %v747, 8
    %749 = vset.pattern.permute.xlu0 %v748
    %750 = vperm.xlu0 %749, %v739
    %v751 = vpop.permute.xlu0 %750
    %v752 = vperm.slane %v647, 0
    %v753 = vlaneseq
    %v754 = vshrl.u32 %v753, 7
    %756 = vset.pattern.permute.xlu0 %v754
    %757 = vperm.xlu0 %756, %v752
    %v758 = vpop.permute.xlu0 %757
    %v759 = vlaneseq
    %v760 = vshrl.u32 %v759, 7
    %v761 = vadd.s32 %v760, 8
    %762 = vset.pattern.permute.xlu0 %v761
    %763 = vperm.xlu0 %762, %v752
    %v764 = vpop.permute.xlu0 %763
    %v765 = vperm.slane %v647, 1
    %v766 = vlaneseq
    %v767 = vshrl.u32 %v766, 7
    %769 = vset.pattern.permute.xlu0 %v767
    %770 = vperm.xlu0 %769, %v765
    %v771 = vpop.permute.xlu0 %770
    %v772 = vlaneseq
    %v773 = vshrl.u32 %v772, 7
    %v774 = vadd.s32 %v773, 8
    %775 = vset.pattern.permute.xlu0 %v774
    %776 = vperm.xlu0 %775, %v765
    %v777 = vpop.permute.xlu0 %776
    %v778 = vperm.slane %v647, 2
    %v779 = vlaneseq
    %v780 = vshrl.u32 %v779, 7
    %782 = vset.pattern.permute.xlu0 %v780
    %783 = vperm.xlu0 %782, %v778
    %v784 = vpop.permute.xlu0 %783
    %v785 = vlaneseq
    %v786 = vshrl.u32 %v785, 7
    %v787 = vadd.s32 %v786, 8
    %788 = vset.pattern.permute.xlu0 %v787
    %789 = vperm.xlu0 %788, %v778
    %v790 = vpop.permute.xlu0 %789
    %v791 = vperm.slane %v647, 3
    %v792 = vlaneseq
    %v793 = vshrl.u32 %v792, 7
    %795 = vset.pattern.permute.xlu0 %v793
    %796 = vperm.xlu0 %795, %v791
    %v797 = vpop.permute.xlu0 %796
    %v798 = vlaneseq
    %v799 = vshrl.u32 %v798, 7
    %v800 = vadd.s32 %v799, 8
    %801 = vset.pattern.permute.xlu0 %v800
    %802 = vperm.xlu0 %801, %v791
    %v803 = vpop.permute.xlu0 %802
    %v804 = vperm.slane %v647, 4
    %v805 = vlaneseq
    %v806 = vshrl.u32 %v805, 7
    %808 = vset.pattern.permute.xlu0 %v806
    %809 = vperm.xlu0 %808, %v804
    %v810 = vpop.permute.xlu0 %809
    %v811 = vlaneseq
    %v812 = vshrl.u32 %v811, 7
    %v813 = vadd.s32 %v812, 8
    %814 = vset.pattern.permute.xlu0 %v813
    %815 = vperm.xlu0 %814, %v804
    %v816 = vpop.permute.xlu0 %815
    %v817 = vperm.slane %v647, 5
    %v818 = vlaneseq
    %v819 = vshrl.u32 %v818, 7
    %821 = vset.pattern.permute.xlu0 %v819
    %822 = vperm.xlu0 %821, %v817
    %v823 = vpop.permute.xlu0 %822
    %v824 = vlaneseq
    %v825 = vshrl.u32 %v824, 7
    %v826 = vadd.s32 %v825, 8
    %827 = vset.pattern.permute.xlu0 %v826
    %828 = vperm.xlu0 %827, %v817
    %v829 = vpop.permute.xlu0 %828
    %v830 = vperm.slane %v647, 6
    %v831 = vlaneseq
    %v832 = vshrl.u32 %v831, 7
    %834 = vset.pattern.permute.xlu0 %v832
    %835 = vperm.xlu0 %834, %v830
    %v836 = vpop.permute.xlu0 %835
    %v837 = vlaneseq
    %v838 = vshrl.u32 %v837, 7
    %v839 = vadd.s32 %v838, 8
    %840 = vset.pattern.permute.xlu0 %v839
    %841 = vperm.xlu0 %840, %v830
    %v842 = vpop.permute.xlu0 %841
    %v843 = vperm.slane %v647, 7
    %v844 = vlaneseq
    %v845 = vshrl.u32 %v844, 7
    %847 = vset.pattern.permute.xlu0 %v845
    %848 = vperm.xlu0 %847, %v843
    %v849 = vpop.permute.xlu0 %848
    %v850 = vlaneseq
    %v851 = vshrl.u32 %v850, 7
    %v852 = vadd.s32 %v851, 8
    %853 = vset.pattern.permute.xlu0 %v852
    %854 = vperm.xlu0 %853, %v843
    %v855 = vpop.permute.xlu0 %854
    %vm856 = vcmask 130048
    %v857 = vsel %vm856, %v646, 0.0
    %858 = vadd.xlane.f32.xlu0 %v857
    %v859 = vpop.xlane.xlu0 %858
    %v860 = vsel %vm856, %v647, 0.0
    %861 = vadd.xlane.f32.xlu0 %v860
    %v862 = vpop.xlane.xlu0 %861
    %v863 = vmax.f32 %v859, 1.0
    %v864 = vmax.f32 %v862, 1.0
    %v865 = vmul.f32 %v614, %v654
    %v866 = vmul.f32 %v615, %v660
    %v867 = vmul.f32 %v616, %v667
    %v868 = vmul.f32 %v617, %v673
    %v869 = vmul.f32 %v618, %v680
    %v870 = vmul.f32 %v619, %v686
    %v871 = vmul.f32 %v620, %v693
    %v872 = vmul.f32 %v621, %v699
    %v873 = vmul.f32 %v622, %v706
    %v874 = vmul.f32 %v623, %v712
    %v875 = vmul.f32 %v624, %v719
    %v876 = vmul.f32 %v625, %v725
    %v877 = vmul.f32 %v626, %v732
    %v878 = vmul.f32 %v627, %v738
    %v879 = vmul.f32 %v628, %v745
    %v880 = vmul.f32 %v629, %v751
    %v881 = vmul.f32 %v630, %v758
    %v882 = vmul.f32 %v631, %v764
    %v883 = vmul.f32 %v632, %v771
    %v884 = vmul.f32 %v633, %v777
    %v885 = vmul.f32 %v634, %v784
    %v886 = vmul.f32 %v635, %v790
    %v887 = vmul.f32 %v636, %v797
    %v888 = vmul.f32 %v637, %v803
    %v889 = vmul.f32 %v638, %v810
    %v890 = vmul.f32 %v639, %v816
    %v891 = vmul.f32 %v640, %v823
    %v892 = vmul.f32 %v641, %v829
    %v893 = vmul.f32 %v642, %v836
    %v894 = vmul.f32 %v643, %v842
    %v895 = vmul.f32 %v644, %v849
    %v896 = vmul.f32 %v645, %v855
    %vm897 = vcmask 523264
    %v898 = vsel %vm897, %v865, 0.0
    %v899 = vsel %vm897, %v866, 0.0
    %v900 = vadd.f32 %v898, %v899
    %v901 = vrot.slane %v900, 4
    %v902 = vadd.f32 %v900, %v901
    %v903 = vrot.slane %v902, 2
    %v904 = vadd.f32 %v902, %v903
    %v905 = vrot.slane %v904, 1
    %v906 = vadd.f32 %v904, %v905
    %v907 = vsel %vm897, %v867, 0.0
    %v908 = vsel %vm897, %v868, 0.0
    %v909 = vadd.f32 %v907, %v908
    %v910 = vrot.slane %v909, 4
    %v911 = vadd.f32 %v909, %v910
    %v912 = vrot.slane %v911, 2
    %v913 = vadd.f32 %v911, %v912
    %v914 = vrot.slane %v913, 1
    %v915 = vadd.f32 %v913, %v914
    %v916 = vsel %vm897, %v869, 0.0
    %v917 = vsel %vm897, %v870, 0.0
    %v918 = vadd.f32 %v916, %v917
    %v919 = vrot.slane %v918, 4
    %v920 = vadd.f32 %v918, %v919
    %v921 = vrot.slane %v920, 2
    %v922 = vadd.f32 %v920, %v921
    %v923 = vrot.slane %v922, 1
    %v924 = vadd.f32 %v922, %v923
    %v925 = vsel %vm897, %v871, 0.0
    %v926 = vsel %vm897, %v872, 0.0
    %v927 = vadd.f32 %v925, %v926
    %v928 = vrot.slane %v927, 4
    %v929 = vadd.f32 %v927, %v928
    %v930 = vrot.slane %v929, 2
    %v931 = vadd.f32 %v929, %v930
    %v932 = vrot.slane %v931, 1
    %v933 = vadd.f32 %v931, %v932
    %v934 = vsel %vm897, %v873, 0.0
    %v935 = vsel %vm897, %v874, 0.0
    %v936 = vadd.f32 %v934, %v935
    %v937 = vrot.slane %v936, 4
    %v938 = vadd.f32 %v936, %v937
    %v939 = vrot.slane %v938, 2
    %v940 = vadd.f32 %v938, %v939
    %v941 = vrot.slane %v940, 1
    %v942 = vadd.f32 %v940, %v941
    %v943 = vsel %vm897, %v875, 0.0
    %v944 = vsel %vm897, %v876, 0.0
    %v945 = vadd.f32 %v943, %v944
    %v946 = vrot.slane %v945, 4
    %v947 = vadd.f32 %v945, %v946
    %v948 = vrot.slane %v947, 2
    %v949 = vadd.f32 %v947, %v948
    %v950 = vrot.slane %v949, 1
    %v951 = vadd.f32 %v949, %v950
    %v952 = vsel %vm897, %v877, 0.0
    %v953 = vsel %vm897, %v878, 0.0
    %v954 = vadd.f32 %v952, %v953
    %v955 = vrot.slane %v954, 4
    %v956 = vadd.f32 %v954, %v955
    %v957 = vrot.slane %v956, 2
    %v958 = vadd.f32 %v956, %v957
    %v959 = vrot.slane %v958, 1
    %v960 = vadd.f32 %v958, %v959
    %v961 = vsel %vm897, %v879, 0.0
    %v962 = vsel %vm897, %v880, 0.0
    %v963 = vadd.f32 %v961, %v962
    %v964 = vrot.slane %v963, 4
    %v965 = vadd.f32 %v963, %v964
    %v966 = vrot.slane %v965, 2
    %v967 = vadd.f32 %v965, %v966
    %v968 = vrot.slane %v967, 1
    %v969 = vadd.f32 %v967, %v968
    %v970 = vsel %vm897, %v881, 0.0
    %v971 = vsel %vm897, %v882, 0.0
    %v972 = vadd.f32 %v970, %v971
    %v973 = vrot.slane %v972, 4
    %v974 = vadd.f32 %v972, %v973
    %v975 = vrot.slane %v974, 2
    %v976 = vadd.f32 %v974, %v975
    %v977 = vrot.slane %v976, 1
    %v978 = vadd.f32 %v976, %v977
    %v979 = vsel %vm897, %v883, 0.0
    %v980 = vsel %vm897, %v884, 0.0
    %v981 = vadd.f32 %v979, %v980
    %v982 = vrot.slane %v981, 4
    %v983 = vadd.f32 %v981, %v982
    %v984 = vrot.slane %v983, 2
    %v985 = vadd.f32 %v983, %v984
    %v986 = vrot.slane %v985, 1
    %v987 = vadd.f32 %v985, %v986
    %v988 = vsel %vm897, %v885, 0.0
    %v989 = vsel %vm897, %v886, 0.0
    %v990 = vadd.f32 %v988, %v989
    %v991 = vrot.slane %v990, 4
    %v992 = vadd.f32 %v990, %v991
    %v993 = vrot.slane %v992, 2
    %v994 = vadd.f32 %v992, %v993
    %v995 = vrot.slane %v994, 1
    %v996 = vadd.f32 %v994, %v995
    %v997 = vsel %vm897, %v887, 0.0
    %v998 = vsel %vm897, %v888, 0.0
    %v999 = vadd.f32 %v997, %v998
    %v1000 = vrot.slane %v999, 4
    %v1001 = vadd.f32 %v999, %v1000
    %v1002 = vrot.slane %v1001, 2
    %v1003 = vadd.f32 %v1001, %v1002
    %v1004 = vrot.slane %v1003, 1
    %v1005 = vadd.f32 %v1003, %v1004
    %v1006 = vsel %vm897, %v889, 0.0
    %v1007 = vsel %vm897, %v890, 0.0
    %v1008 = vadd.f32 %v1006, %v1007
    %v1009 = vrot.slane %v1008, 4
    %v1010 = vadd.f32 %v1008, %v1009
    %v1011 = vrot.slane %v1010, 2
    %v1012 = vadd.f32 %v1010, %v1011
    %v1013 = vrot.slane %v1012, 1
    %v1014 = vadd.f32 %v1012, %v1013
    %v1015 = vsel %vm897, %v891, 0.0
    %v1016 = vsel %vm897, %v892, 0.0
    %v1017 = vadd.f32 %v1015, %v1016
    %v1018 = vrot.slane %v1017, 4
    %v1019 = vadd.f32 %v1017, %v1018
    %v1020 = vrot.slane %v1019, 2
    %v1021 = vadd.f32 %v1019, %v1020
    %v1022 = vrot.slane %v1021, 1
    %v1023 = vadd.f32 %v1021, %v1022
    %v1024 = vsel %vm897, %v893, 0.0
    %v1025 = vsel %vm897, %v894, 0.0
    %v1026 = vadd.f32 %v1024, %v1025
    %v1027 = vrot.slane %v1026, 4
    %v1028 = vadd.f32 %v1026, %v1027
    %v1029 = vrot.slane %v1028, 2
    %v1030 = vadd.f32 %v1028, %v1029
    %v1031 = vrot.slane %v1030, 1
    %v1032 = vadd.f32 %v1030, %v1031
    %v1033 = vsel %vm897, %v895, 0.0
    %v1034 = vsel %vm897, %v896, 0.0
    %v1035 = vadd.f32 %v1033, %v1034
    %v1036 = vrot.slane %v1035, 4
    %v1037 = vadd.f32 %v1035, %v1036
    %v1038 = vrot.slane %v1037, 2
    %v1039 = vadd.f32 %v1037, %v1038
    %v1040 = vrot.slane %v1039, 1
    %v1041 = vadd.f32 %v1039, %v1040
    %v1042 = vrcp.pop %v863
    %v1043 = vrcp.pop %v864
    %v1046 = vrot.slane %v1042, 1
    %v1047 = vrot.slane %v1042, 2
    %v1048 = vrot.slane %v1042, 3
    %v1049 = vrot.slane %v1042, 4
    %v1050 = vrot.slane %v1042, 5
    %v1051 = vrot.slane %v1042, 6
    %v1052 = vrot.slane %v1042, 7
    %v1053 = vrot.slane %v1043, 1
    %v1054 = vrot.slane %v1043, 2
    %v1055 = vrot.slane %v1043, 3
    %v1056 = vrot.slane %v1043, 4
    %v1057 = vrot.slane %v1043, 5
    %v1058 = vrot.slane %v1043, 6
    %v1059 = vrot.slane %v1043, 7
    %v1076 = vmul.f32 %v906, %v1042
    %v1077 = vmul.f32 %v915, %v1046
    %v1078 = vmul.f32 %v924, %v1047
    %v1079 = vmul.f32 %v933, %v1048
    %v1080 = vmul.f32 %v942, %v1049
    %v1081 = vmul.f32 %v951, %v1050
    %v1082 = vmul.f32 %v960, %v1051
    %v1083 = vmul.f32 %v969, %v1052
    %v1084 = vmul.f32 %v978, %v1043
    %v1085 = vmul.f32 %v987, %v1053
    %v1086 = vmul.f32 %v996, %v1054
    %v1087 = vmul.f32 %v1005, %v1055
    %v1088 = vmul.f32 %v1014, %v1056
    %v1089 = vmul.f32 %v1023, %v1057
    %v1090 = vmul.f32 %v1032, %v1058
    %v1091 = vmul.f32 %v1041, %v1059
    %v1092 = vsub.f32 %v863, 1.0
    %v1093 = vsub.f32 %v864, 1.0
    %v1094 = vmax.f32 %v1092, 1.0
    %v1095 = vmax.f32 %v1093, 1.0
    %v1096 = vperm.slane %v1076, 0
    %v1097 = vperm.slane %v1077, 0
    %v1098 = vperm.slane %v1078, 0
    %v1099 = vperm.slane %v1079, 0
    %v1100 = vperm.slane %v1080, 0
    %v1101 = vperm.slane %v1081, 0
    %v1102 = vperm.slane %v1082, 0
    %v1103 = vperm.slane %v1083, 0
    %v1104 = vperm.slane %v1084, 0
    %v1105 = vperm.slane %v1085, 0
    %v1106 = vperm.slane %v1086, 0
    %v1107 = vperm.slane %v1087, 0
    %v1108 = vperm.slane %v1088, 0
    %v1109 = vperm.slane %v1089, 0
    %v1110 = vperm.slane %v1090, 0
    %v1111 = vperm.slane %v1091, 0
    %v1112 = vsub.f32 %v614, %v1096
    %v1113 = vsub.f32 %v615, %v1096
    %v1114 = vsub.f32 %v616, %v1097
    %v1115 = vsub.f32 %v617, %v1097
    %v1116 = vsub.f32 %v618, %v1098
    %v1117 = vsub.f32 %v619, %v1098
    %v1118 = vsub.f32 %v620, %v1099
    %v1119 = vsub.f32 %v621, %v1099
    %v1120 = vsub.f32 %v622, %v1100
    %v1121 = vsub.f32 %v623, %v1100
    %v1122 = vsub.f32 %v624, %v1101
    %v1123 = vsub.f32 %v625, %v1101
    %v1124 = vsub.f32 %v626, %v1102
    %v1125 = vsub.f32 %v627, %v1102
    %v1126 = vsub.f32 %v628, %v1103
    %v1127 = vsub.f32 %v629, %v1103
    %v1128 = vsub.f32 %v630, %v1104
    %v1129 = vsub.f32 %v631, %v1104
    %v1130 = vsub.f32 %v632, %v1105
    %v1131 = vsub.f32 %v633, %v1105
    %v1132 = vsub.f32 %v634, %v1106
    %v1133 = vsub.f32 %v635, %v1106
    %v1134 = vsub.f32 %v636, %v1107
    %v1135 = vsub.f32 %v637, %v1107
    %v1136 = vsub.f32 %v638, %v1108
    %v1137 = vsub.f32 %v639, %v1108
    %v1138 = vsub.f32 %v640, %v1109
    %v1139 = vsub.f32 %v641, %v1109
    %v1140 = vsub.f32 %v642, %v1110
    %v1141 = vsub.f32 %v643, %v1110
    %v1142 = vsub.f32 %v644, %v1111
    %v1143 = vsub.f32 %v645, %v1111
    %v1144 = vmul.f32 %v1112, %v654
    %v1145 = vmul.f32 %v1113, %v660
    %v1146 = vmul.f32 %v1114, %v667
    %v1147 = vmul.f32 %v1115, %v673
    %v1148 = vmul.f32 %v1116, %v680
    %v1149 = vmul.f32 %v1117, %v686
    %v1150 = vmul.f32 %v1118, %v693
    %v1151 = vmul.f32 %v1119, %v699
    %v1152 = vmul.f32 %v1120, %v706
    %v1153 = vmul.f32 %v1121, %v712
    %v1154 = vmul.f32 %v1122, %v719
    %v1155 = vmul.f32 %v1123, %v725
    %v1156 = vmul.f32 %v1124, %v732
    %v1157 = vmul.f32 %v1125, %v738
    %v1158 = vmul.f32 %v1126, %v745
    %v1159 = vmul.f32 %v1127, %v751
    %v1160 = vmul.f32 %v1128, %v758
    %v1161 = vmul.f32 %v1129, %v764
    %v1162 = vmul.f32 %v1130, %v771
    %v1163 = vmul.f32 %v1131, %v777
    %v1164 = vmul.f32 %v1132, %v784
    %v1165 = vmul.f32 %v1133, %v790
    %v1166 = vmul.f32 %v1134, %v797
    %v1167 = vmul.f32 %v1135, %v803
    %v1168 = vmul.f32 %v1136, %v810
    %v1169 = vmul.f32 %v1137, %v816
    %v1170 = vmul.f32 %v1138, %v823
    %v1171 = vmul.f32 %v1139, %v829
    %v1172 = vmul.f32 %v1140, %v836
    %v1173 = vmul.f32 %v1141, %v842
    %v1174 = vmul.f32 %v1142, %v849
    %v1175 = vmul.f32 %v1143, %v855
    %v1176 = vmul.f32 %v1144, %v1144
    %v1177 = vmul.f32 %v1145, %v1145
    %v1178 = vmul.f32 %v1146, %v1146
    %v1179 = vmul.f32 %v1147, %v1147
    %v1180 = vmul.f32 %v1148, %v1148
    %v1181 = vmul.f32 %v1149, %v1149
    %v1182 = vmul.f32 %v1150, %v1150
    %v1183 = vmul.f32 %v1151, %v1151
    %v1184 = vmul.f32 %v1152, %v1152
    %v1185 = vmul.f32 %v1153, %v1153
    %v1186 = vmul.f32 %v1154, %v1154
    %v1187 = vmul.f32 %v1155, %v1155
    %v1188 = vmul.f32 %v1156, %v1156
    %v1189 = vmul.f32 %v1157, %v1157
    %v1190 = vmul.f32 %v1158, %v1158
    %v1191 = vmul.f32 %v1159, %v1159
    %v1192 = vmul.f32 %v1160, %v1160
    %v1193 = vmul.f32 %v1161, %v1161
    %v1194 = vmul.f32 %v1162, %v1162
    %v1195 = vmul.f32 %v1163, %v1163
    %v1196 = vmul.f32 %v1164, %v1164
    %v1197 = vmul.f32 %v1165, %v1165
    %v1198 = vmul.f32 %v1166, %v1166
    %v1199 = vmul.f32 %v1167, %v1167
    %v1200 = vmul.f32 %v1168, %v1168
    %v1201 = vmul.f32 %v1169, %v1169
    %v1202 = vmul.f32 %v1170, %v1170
    %v1203 = vmul.f32 %v1171, %v1171
    %v1204 = vmul.f32 %v1172, %v1172
    %v1205 = vmul.f32 %v1173, %v1173
    %v1206 = vmul.f32 %v1174, %v1174
    %v1207 = vmul.f32 %v1175, %v1175
    %v1208 = vsel %vm897, %v1176, 0.0
    %v1209 = vsel %vm897, %v1177, 0.0
    %v1210 = vadd.f32 %v1208, %v1209
    %v1211 = vrot.slane %v1210, 4
    %v1212 = vadd.f32 %v1210, %v1211
    %v1213 = vrot.slane %v1212, 2
    %v1214 = vadd.f32 %v1212, %v1213
    %v1215 = vrot.slane %v1214, 1
    %v1216 = vadd.f32 %v1214, %v1215
    %v1217 = vsel %vm897, %v1178, 0.0
    %v1218 = vsel %vm897, %v1179, 0.0
    %v1219 = vadd.f32 %v1217, %v1218
    %v1220 = vrot.slane %v1219, 4
    %v1221 = vadd.f32 %v1219, %v1220
    %v1222 = vrot.slane %v1221, 2
    %v1223 = vadd.f32 %v1221, %v1222
    %v1224 = vrot.slane %v1223, 1
    %v1225 = vadd.f32 %v1223, %v1224
    %v1226 = vsel %vm897, %v1180, 0.0
    %v1227 = vsel %vm897, %v1181, 0.0
    %v1228 = vadd.f32 %v1226, %v1227
    %v1229 = vrot.slane %v1228, 4
    %v1230 = vadd.f32 %v1228, %v1229
    %v1231 = vrot.slane %v1230, 2
    %v1232 = vadd.f32 %v1230, %v1231
    %v1233 = vrot.slane %v1232, 1
    %v1234 = vadd.f32 %v1232, %v1233
    %v1235 = vsel %vm897, %v1182, 0.0
    %v1236 = vsel %vm897, %v1183, 0.0
    %v1237 = vadd.f32 %v1235, %v1236
    %v1238 = vrot.slane %v1237, 4
    %v1239 = vadd.f32 %v1237, %v1238
    %v1240 = vrot.slane %v1239, 2
    %v1241 = vadd.f32 %v1239, %v1240
    %v1242 = vrot.slane %v1241, 1
    %v1243 = vadd.f32 %v1241, %v1242
    %v1244 = vsel %vm897, %v1184, 0.0
    %v1245 = vsel %vm897, %v1185, 0.0
    %v1246 = vadd.f32 %v1244, %v1245
    %v1247 = vrot.slane %v1246, 4
    %v1248 = vadd.f32 %v1246, %v1247
    %v1249 = vrot.slane %v1248, 2
    %v1250 = vadd.f32 %v1248, %v1249
    %v1251 = vrot.slane %v1250, 1
    %v1252 = vadd.f32 %v1250, %v1251
    %v1253 = vsel %vm897, %v1186, 0.0
    %v1254 = vsel %vm897, %v1187, 0.0
    %v1255 = vadd.f32 %v1253, %v1254
    %v1256 = vrot.slane %v1255, 4
    %v1257 = vadd.f32 %v1255, %v1256
    %v1258 = vrot.slane %v1257, 2
    %v1259 = vadd.f32 %v1257, %v1258
    %v1260 = vrot.slane %v1259, 1
    %v1261 = vadd.f32 %v1259, %v1260
    %v1262 = vsel %vm897, %v1188, 0.0
    %v1263 = vsel %vm897, %v1189, 0.0
    %v1264 = vadd.f32 %v1262, %v1263
    %v1265 = vrot.slane %v1264, 4
    %v1266 = vadd.f32 %v1264, %v1265
    %v1267 = vrot.slane %v1266, 2
    %v1268 = vadd.f32 %v1266, %v1267
    %v1269 = vrot.slane %v1268, 1
    %v1270 = vadd.f32 %v1268, %v1269
    %v1271 = vsel %vm897, %v1190, 0.0
    %v1272 = vsel %vm897, %v1191, 0.0
    %v1273 = vadd.f32 %v1271, %v1272
    %v1274 = vrot.slane %v1273, 4
    %v1275 = vadd.f32 %v1273, %v1274
    %v1276 = vrot.slane %v1275, 2
    %v1277 = vadd.f32 %v1275, %v1276
    %v1278 = vrot.slane %v1277, 1
    %v1279 = vadd.f32 %v1277, %v1278
    %v1280 = vsel %vm897, %v1192, 0.0
    %v1281 = vsel %vm897, %v1193, 0.0
    %v1282 = vadd.f32 %v1280, %v1281
    %v1283 = vrot.slane %v1282, 4
    %v1284 = vadd.f32 %v1282, %v1283
    %v1285 = vrot.slane %v1284, 2
    %v1286 = vadd.f32 %v1284, %v1285
    %v1287 = vrot.slane %v1286, 1
    %v1288 = vadd.f32 %v1286, %v1287
    %v1289 = vsel %vm897, %v1194, 0.0
    %v1290 = vsel %vm897, %v1195, 0.0
    %v1291 = vadd.f32 %v1289, %v1290
    %v1292 = vrot.slane %v1291, 4
    %v1293 = vadd.f32 %v1291, %v1292
    %v1294 = vrot.slane %v1293, 2
    %v1295 = vadd.f32 %v1293, %v1294
    %v1296 = vrot.slane %v1295, 1
    %v1297 = vadd.f32 %v1295, %v1296
    %v1298 = vsel %vm897, %v1196, 0.0
    %v1299 = vsel %vm897, %v1197, 0.0
    %v1300 = vadd.f32 %v1298, %v1299
    %v1301 = vrot.slane %v1300, 4
    %v1302 = vadd.f32 %v1300, %v1301
    %v1303 = vrot.slane %v1302, 2
    %v1304 = vadd.f32 %v1302, %v1303
    %v1305 = vrot.slane %v1304, 1
    %v1306 = vadd.f32 %v1304, %v1305
    %v1307 = vsel %vm897, %v1198, 0.0
    %v1308 = vsel %vm897, %v1199, 0.0
    %v1309 = vadd.f32 %v1307, %v1308
    %v1310 = vrot.slane %v1309, 4
    %v1311 = vadd.f32 %v1309, %v1310
    %v1312 = vrot.slane %v1311, 2
    %v1313 = vadd.f32 %v1311, %v1312
    %v1314 = vrot.slane %v1313, 1
    %v1315 = vadd.f32 %v1313, %v1314
    %v1316 = vsel %vm897, %v1200, 0.0
    %v1317 = vsel %vm897, %v1201, 0.0
    %v1318 = vadd.f32 %v1316, %v1317
    %v1319 = vrot.slane %v1318, 4
    %v1320 = vadd.f32 %v1318, %v1319
    %v1321 = vrot.slane %v1320, 2
    %v1322 = vadd.f32 %v1320, %v1321
    %v1323 = vrot.slane %v1322, 1
    %v1324 = vadd.f32 %v1322, %v1323
    %v1325 = vsel %vm897, %v1202, 0.0
    %v1326 = vsel %vm897, %v1203, 0.0
    %v1327 = vadd.f32 %v1325, %v1326
    %v1328 = vrot.slane %v1327, 4
    %v1329 = vadd.f32 %v1327, %v1328
    %v1330 = vrot.slane %v1329, 2
    %v1331 = vadd.f32 %v1329, %v1330
    %v1332 = vrot.slane %v1331, 1
    %v1333 = vadd.f32 %v1331, %v1332
    %v1334 = vsel %vm897, %v1204, 0.0
    %v1335 = vsel %vm897, %v1205, 0.0
    %v1336 = vadd.f32 %v1334, %v1335
    %v1337 = vrot.slane %v1336, 4
    %v1338 = vadd.f32 %v1336, %v1337
    %v1339 = vrot.slane %v1338, 2
    %v1340 = vadd.f32 %v1338, %v1339
    %v1341 = vrot.slane %v1340, 1
    %v1342 = vadd.f32 %v1340, %v1341
    %v1343 = vsel %vm897, %v1206, 0.0
    %v1344 = vsel %vm897, %v1207, 0.0
    %v1345 = vadd.f32 %v1343, %v1344
    %v1346 = vrot.slane %v1345, 4
    %v1347 = vadd.f32 %v1345, %v1346
    %v1348 = vrot.slane %v1347, 2
    %v1349 = vadd.f32 %v1347, %v1348
    %v1350 = vrot.slane %v1349, 1
    %v1351 = vadd.f32 %v1349, %v1350
    %v1352 = vrcp.pop %v1094
    %v1353 = vrcp.pop %v1095
    %v1356 = vrot.slane %v1352, 1
    %v1357 = vrot.slane %v1352, 2
    %v1358 = vrot.slane %v1352, 3
    %v1359 = vrot.slane %v1352, 4
    %v1360 = vrot.slane %v1352, 5
    %v1361 = vrot.slane %v1352, 6
    %v1362 = vrot.slane %v1352, 7
    %v1363 = vrot.slane %v1353, 1
    %v1364 = vrot.slane %v1353, 2
    %v1365 = vrot.slane %v1353, 3
    %v1366 = vrot.slane %v1353, 4
    %v1367 = vrot.slane %v1353, 5
    %v1368 = vrot.slane %v1353, 6
    %v1369 = vrot.slane %v1353, 7
    %v1386 = vmul.f32 %v1216, %v1352
    %v1387 = vmul.f32 %v1225, %v1356
    %v1388 = vmul.f32 %v1234, %v1357
    %v1389 = vmul.f32 %v1243, %v1358
    %v1390 = vmul.f32 %v1252, %v1359
    %v1391 = vmul.f32 %v1261, %v1360
    %v1392 = vmul.f32 %v1270, %v1361
    %v1393 = vmul.f32 %v1279, %v1362
    %v1394 = vmul.f32 %v1288, %v1353
    %v1395 = vmul.f32 %v1297, %v1363
    %v1396 = vmul.f32 %v1306, %v1364
    %v1397 = vmul.f32 %v1315, %v1365
    %v1398 = vmul.f32 %v1324, %v1366
    %v1399 = vmul.f32 %v1333, %v1367
    %v1400 = vmul.f32 %v1342, %v1368
    %v1401 = vmul.f32 %v1351, %v1369
    %v1402 = vadd.f32 %v1386, 1e-31
    %v1403 = vadd.f32 %v1387, 1e-31
    %v1404 = vadd.f32 %v1388, 1e-31
    %v1405 = vadd.f32 %v1389, 1e-31
    %v1406 = vadd.f32 %v1390, 1e-31
    %v1407 = vadd.f32 %v1391, 1e-31
    %v1408 = vadd.f32 %v1392, 1e-31
    %v1409 = vadd.f32 %v1393, 1e-31
    %v1410 = vadd.f32 %v1394, 1e-31
    %v1411 = vadd.f32 %v1395, 1e-31
    %v1412 = vadd.f32 %v1396, 1e-31
    %v1413 = vadd.f32 %v1397, 1e-31
    %v1414 = vadd.f32 %v1398, 1e-31
    %v1415 = vadd.f32 %v1399, 1e-31
    %v1416 = vadd.f32 %v1400, 1e-31
    %v1417 = vadd.f32 %v1401, 1e-31
    %v1418 = vrsqrt.pop %v1402
    %v1419 = vmul.f32 %v1418, %v1402
    %v1420 = vmul.f32 %v1419, %v1418
    %v1421 = vmul.f32 0.5, %v1420
    %v1422 = vsub.f32 1.5, %v1421
    %v1423 = vmul.f32 %v1418, %v1422
    %v1424 = vmul.f32 %v1402, %v1423
    %vm1425 = vcmp.eq.f32.partialorder %v1402, inf
    %v1426 = vsel %vm1425, %v1402, %v1424
    %vm1427 = vcmp.eq.f32.partialorder %v1402, 0.0
    %v1428 = vand.u32 %v1402, 2147483648
    %v1429 = vsel %vm1427, %v1428, %v1426
    %v1430 = vrsqrt.pop %v1403
    %v1431 = vmul.f32 %v1430, %v1403
    %v1432 = vmul.f32 %v1431, %v1430
    %v1433 = vmul.f32 0.5, %v1432
    %v1434 = vsub.f32 1.5, %v1433
    %v1435 = vmul.f32 %v1430, %v1434
    %v1436 = vmul.f32 %v1403, %v1435
    %vm1437 = vcmp.eq.f32.partialorder %v1403, inf
    %v1438 = vsel %vm1437, %v1403, %v1436
    %vm1439 = vcmp.eq.f32.partialorder %v1403, 0.0
    %v1440 = vand.u32 %v1403, 2147483648
    %v1441 = vsel %vm1439, %v1440, %v1438
    %v1442 = vrsqrt.pop %v1404
    %v1443 = vmul.f32 %v1442, %v1404
    %v1444 = vmul.f32 %v1443, %v1442
    %v1445 = vmul.f32 0.5, %v1444
    %v1446 = vsub.f32 1.5, %v1445
    %v1447 = vmul.f32 %v1442, %v1446
    %v1448 = vmul.f32 %v1404, %v1447
    %vm1449 = vcmp.eq.f32.partialorder %v1404, inf
    %v1450 = vsel %vm1449, %v1404, %v1448
    %vm1451 = vcmp.eq.f32.partialorder %v1404, 0.0
    %v1452 = vand.u32 %v1404, 2147483648
    %v1453 = vsel %vm1451, %v1452, %v1450
    %v1454 = vrsqrt.pop %v1405
    %v1455 = vmul.f32 %v1454, %v1405
    %v1456 = vmul.f32 %v1455, %v1454
    %v1457 = vmul.f32 0.5, %v1456
    %v1458 = vsub.f32 1.5, %v1457
    %v1459 = vmul.f32 %v1454, %v1458
    %v1460 = vmul.f32 %v1405, %v1459
    %vm1461 = vcmp.eq.f32.partialorder %v1405, inf
    %v1462 = vsel %vm1461, %v1405, %v1460
    %vm1463 = vcmp.eq.f32.partialorder %v1405, 0.0
    %v1464 = vand.u32 %v1405, 2147483648
    %v1465 = vsel %vm1463, %v1464, %v1462
    %v1466 = vrsqrt.pop %v1406
    %v1467 = vmul.f32 %v1466, %v1406
    %v1468 = vmul.f32 %v1467, %v1466
    %v1469 = vmul.f32 0.5, %v1468
    %v1470 = vsub.f32 1.5, %v1469
    %v1471 = vmul.f32 %v1466, %v1470
    %v1472 = vmul.f32 %v1406, %v1471
    %vm1473 = vcmp.eq.f32.partialorder %v1406, inf
    %v1474 = vsel %vm1473, %v1406, %v1472
    %vm1475 = vcmp.eq.f32.partialorder %v1406, 0.0
    %v1476 = vand.u32 %v1406, 2147483648
    %v1477 = vsel %vm1475, %v1476, %v1474
    %v1478 = vrsqrt.pop %v1407
    %v1479 = vmul.f32 %v1478, %v1407
    %v1480 = vmul.f32 %v1479, %v1478
    %v1481 = vmul.f32 0.5, %v1480
    %v1482 = vsub.f32 1.5, %v1481
    %v1483 = vmul.f32 %v1478, %v1482
    %v1484 = vmul.f32 %v1407, %v1483
    %vm1485 = vcmp.eq.f32.partialorder %v1407, inf
    %v1486 = vsel %vm1485, %v1407, %v1484
    %vm1487 = vcmp.eq.f32.partialorder %v1407, 0.0
    %v1488 = vand.u32 %v1407, 2147483648
    %v1489 = vsel %vm1487, %v1488, %v1486
    %v1490 = vrsqrt.pop %v1408
    %v1491 = vmul.f32 %v1490, %v1408
    %v1492 = vmul.f32 %v1491, %v1490
    %v1493 = vmul.f32 0.5, %v1492
    %v1494 = vsub.f32 1.5, %v1493
    %v1495 = vmul.f32 %v1490, %v1494
    %v1496 = vmul.f32 %v1408, %v1495
    %vm1497 = vcmp.eq.f32.partialorder %v1408, inf
    %v1498 = vsel %vm1497, %v1408, %v1496
    %vm1499 = vcmp.eq.f32.partialorder %v1408, 0.0
    %v1500 = vand.u32 %v1408, 2147483648
    %v1501 = vsel %vm1499, %v1500, %v1498
    %v1502 = vrsqrt.pop %v1409
    %v1503 = vmul.f32 %v1502, %v1409
    %v1504 = vmul.f32 %v1503, %v1502
    %v1505 = vmul.f32 0.5, %v1504
    %v1506 = vsub.f32 1.5, %v1505
    %v1507 = vmul.f32 %v1502, %v1506
    %v1508 = vmul.f32 %v1409, %v1507
    %vm1509 = vcmp.eq.f32.partialorder %v1409, inf
    %v1510 = vsel %vm1509, %v1409, %v1508
    %vm1511 = vcmp.eq.f32.partialorder %v1409, 0.0
    %v1512 = vand.u32 %v1409, 2147483648
    %v1513 = vsel %vm1511, %v1512, %v1510
    %v1514 = vrsqrt.pop %v1410
    %v1515 = vmul.f32 %v1514, %v1410
    %v1516 = vmul.f32 %v1515, %v1514
    %v1517 = vmul.f32 0.5, %v1516
    %v1518 = vsub.f32 1.5, %v1517
    %v1519 = vmul.f32 %v1514, %v1518
    %v1520 = vmul.f32 %v1410, %v1519
    %vm1521 = vcmp.eq.f32.partialorder %v1410, inf
    %v1522 = vsel %vm1521, %v1410, %v1520
    %vm1523 = vcmp.eq.f32.partialorder %v1410, 0.0
    %v1524 = vand.u32 %v1410, 2147483648
    %v1525 = vsel %vm1523, %v1524, %v1522
    %v1526 = vrsqrt.pop %v1411
    %v1527 = vmul.f32 %v1526, %v1411
    %v1528 = vmul.f32 %v1527, %v1526
    %v1529 = vmul.f32 0.5, %v1528
    %v1530 = vsub.f32 1.5, %v1529
    %v1531 = vmul.f32 %v1526, %v1530
    %v1532 = vmul.f32 %v1411, %v1531
    %vm1533 = vcmp.eq.f32.partialorder %v1411, inf
    %v1534 = vsel %vm1533, %v1411, %v1532
    %vm1535 = vcmp.eq.f32.partialorder %v1411, 0.0
    %v1536 = vand.u32 %v1411, 2147483648
    %v1537 = vsel %vm1535, %v1536, %v1534
    %v1538 = vrsqrt.pop %v1412
    %v1539 = vmul.f32 %v1538, %v1412
    %v1540 = vmul.f32 %v1539, %v1538
    %v1541 = vmul.f32 0.5, %v1540
    %v1542 = vsub.f32 1.5, %v1541
    %v1543 = vmul.f32 %v1538, %v1542
    %v1544 = vmul.f32 %v1412, %v1543
    %vm1545 = vcmp.eq.f32.partialorder %v1412, inf
    %v1546 = vsel %vm1545, %v1412, %v1544
    %vm1547 = vcmp.eq.f32.partialorder %v1412, 0.0
    %v1548 = vand.u32 %v1412, 2147483648
    %v1549 = vsel %vm1547, %v1548, %v1546
    %v1550 = vrsqrt.pop %v1413
    %v1551 = vmul.f32 %v1550, %v1413
    %v1552 = vmul.f32 %v1551, %v1550
    %v1553 = vmul.f32 0.5, %v1552
    %v1554 = vsub.f32 1.5, %v1553
    %v1555 = vmul.f32 %v1550, %v1554
    %v1556 = vmul.f32 %v1413, %v1555
    %vm1557 = vcmp.eq.f32.partialorder %v1413, inf
    %v1558 = vsel %vm1557, %v1413, %v1556
    %vm1559 = vcmp.eq.f32.partialorder %v1413, 0.0
    %v1560 = vand.u32 %v1413, 2147483648
    %v1561 = vsel %vm1559, %v1560, %v1558
    %v1562 = vrsqrt.pop %v1414
    %v1563 = vmul.f32 %v1562, %v1414
    %v1564 = vmul.f32 %v1563, %v1562
    %v1565 = vmul.f32 0.5, %v1564
    %v1566 = vsub.f32 1.5, %v1565
    %v1567 = vmul.f32 %v1562, %v1566
    %v1568 = vmul.f32 %v1414, %v1567
    %vm1569 = vcmp.eq.f32.partialorder %v1414, inf
    %v1570 = vsel %vm1569, %v1414, %v1568
    %vm1571 = vcmp.eq.f32.partialorder %v1414, 0.0
    %v1572 = vand.u32 %v1414, 2147483648
    %v1573 = vsel %vm1571, %v1572, %v1570
    %v1574 = vrsqrt.pop %v1415
    %v1575 = vmul.f32 %v1574, %v1415
    %v1576 = vmul.f32 %v1575, %v1574
    %v1577 = vmul.f32 0.5, %v1576
    %v1578 = vsub.f32 1.5, %v1577
    %v1579 = vmul.f32 %v1574, %v1578
    %v1580 = vmul.f32 %v1415, %v1579
    %vm1581 = vcmp.eq.f32.partialorder %v1415, inf
    %v1582 = vsel %vm1581, %v1415, %v1580
    %vm1583 = vcmp.eq.f32.partialorder %v1415, 0.0
    %v1584 = vand.u32 %v1415, 2147483648
    %v1585 = vsel %vm1583, %v1584, %v1582
    %v1586 = vrsqrt.pop %v1416
    %v1587 = vmul.f32 %v1586, %v1416
    %v1588 = vmul.f32 %v1587, %v1586
    %v1589 = vmul.f32 0.5, %v1588
    %v1590 = vsub.f32 1.5, %v1589
    %v1591 = vmul.f32 %v1586, %v1590
    %v1592 = vmul.f32 %v1416, %v1591
    %vm1593 = vcmp.eq.f32.partialorder %v1416, inf
    %v1594 = vsel %vm1593, %v1416, %v1592
    %vm1595 = vcmp.eq.f32.partialorder %v1416, 0.0
    %v1596 = vand.u32 %v1416, 2147483648
    %v1597 = vsel %vm1595, %v1596, %v1594
    %v1598 = vrsqrt.pop %v1417
    %v1599 = vmul.f32 %v1598, %v1417
    %v1600 = vmul.f32 %v1599, %v1598
    %v1601 = vmul.f32 0.5, %v1600
    %v1602 = vsub.f32 1.5, %v1601
    %v1603 = vmul.f32 %v1598, %v1602
    %v1604 = vmul.f32 %v1417, %v1603
    %vm1605 = vcmp.eq.f32.partialorder %v1417, inf
    %v1606 = vsel %vm1605, %v1417, %v1604
    %vm1607 = vcmp.eq.f32.partialorder %v1417, 0.0
    %v1608 = vand.u32 %v1417, 2147483648
    %v1609 = vsel %vm1607, %v1608, %v1606
    %v1610 = vpack.c.bf16 %v1076, %v1076
    %v1611 = vpack.c.bf16 %v1077, %v1077
    %v1612 = vpack.c.bf16 %v1078, %v1078
    %v1613 = vpack.c.bf16 %v1079, %v1079
    %v1614 = vpack.c.bf16 %v1080, %v1080
    %v1615 = vpack.c.bf16 %v1081, %v1081
    %v1616 = vpack.c.bf16 %v1082, %v1082
    %v1617 = vpack.c.bf16 %v1083, %v1083
    %v1618 = vpack.c.bf16 %v1084, %v1084
    %v1619 = vpack.c.bf16 %v1085, %v1085
    %v1620 = vpack.c.bf16 %v1086, %v1086
    %v1621 = vpack.c.bf16 %v1087, %v1087
    %v1622 = vpack.c.bf16 %v1088, %v1088
    %v1623 = vpack.c.bf16 %v1089, %v1089
    %v1624 = vpack.c.bf16 %v1090, %v1090
    %v1625 = vpack.c.bf16 %v1091, %v1091
    %v1626 = vld [vmem:[%s7] sm:$0xf]
    %v1627 = vld [vmem:[%s7 + $0x4] sm:$0xf]
    %v1628 = vld [vmem:[%s7 + $0x8] sm:$0xf]
    %v1629 = vld [vmem:[%s7 + $0xc] sm:$0xf]
    %v1630 = vld [vmem:[%s7 + $0x10] sm:$0xf]
    %v1631 = vld [vmem:[%s7 + $0x14] sm:$0xf]
    %v1632 = vld [vmem:[%s7 + $0x18] sm:$0xf]
    %v1633 = vld [vmem:[%s7 + $0x1c] sm:$0xf]
    %v1634 = vpack.c.bf16 %v1429, %v1429
    %v1635 = vpack.c.bf16 %v1441, %v1441
    %v1636 = vpack.c.bf16 %v1453, %v1453
    %v1637 = vpack.c.bf16 %v1465, %v1465
    %v1638 = vpack.c.bf16 %v1477, %v1477
    %v1639 = vpack.c.bf16 %v1489, %v1489
    %v1640 = vpack.c.bf16 %v1501, %v1501
    %v1641 = vpack.c.bf16 %v1513, %v1513
    %v1642 = vpack.c.bf16 %v1525, %v1525
    %v1643 = vpack.c.bf16 %v1537, %v1537
    %v1644 = vpack.c.bf16 %v1549, %v1549
    %v1645 = vpack.c.bf16 %v1561, %v1561
    %v1646 = vpack.c.bf16 %v1573, %v1573
    %v1647 = vpack.c.bf16 %v1585, %v1585
    %v1648 = vpack.c.bf16 %v1597, %v1597
    %v1649 = vpack.c.bf16 %v1609, %v1609
    %v1650 = vld [vmem:[#allocation8] sm:$0xf]
    %v1651 = vld [vmem:[#allocation8 + $0x4] sm:$0xf]
    %v1652 = vld [vmem:[#allocation8 + $0x8] sm:$0xf]
    %v1653 = vld [vmem:[#allocation8 + $0xc] sm:$0xf]
    %v1654 = vld [vmem:[#allocation8 + $0x10] sm:$0xf]
    %v1655 = vld [vmem:[#allocation8 + $0x14] sm:$0xf]
    %v1656 = vld [vmem:[#allocation8 + $0x18] sm:$0xf]
    %v1657 = vld [vmem:[#allocation8 + $0x1c] sm:$0xf]
    %v1674 = vunpack.c.l.b16 %v1634
    %v1675 = vunpack.c.l.b16 %v1635
    %v1676 = vunpack.c.l.b16 %v1636
    %v1677 = vunpack.c.l.b16 %v1637
    %v1678 = vunpack.c.l.b16 %v1638
    %v1679 = vunpack.c.l.b16 %v1639
    %v1680 = vunpack.c.l.b16 %v1640
    %v1681 = vunpack.c.l.b16 %v1641
    %v1682 = vunpack.c.l.b16 %v1642
    %v1683 = vunpack.c.l.b16 %v1643
    %v1684 = vunpack.c.l.b16 %v1644
    %v1685 = vunpack.c.l.b16 %v1645
    %v1686 = vunpack.c.l.b16 %v1646
    %v1687 = vunpack.c.l.b16 %v1647
    %v1688 = vunpack.c.l.b16 %v1648
    %v1689 = vunpack.c.l.b16 %v1649
    %v1690 = vrot.slane %v1675, 7
    %vm1691 = vcmask 1041409
    %v1692 = vsel %vm1691, %v1690, %v1674
    %v1693 = vrot.slane %v1676, 6
    %vm1694 = vcmask 1042434
    %v1695 = vsel %vm1694, %v1693, %v1692
    %v1696 = vrot.slane %v1677, 5
    %vm1697 = vcmask 1043459
    %v1698 = vsel %vm1697, %v1696, %v1695
    %v1699 = vrot.slane %v1678, 4
    %vm1700 = vcmask 1044484
    %v1701 = vsel %vm1700, %v1699, %v1698
    %v1702 = vrot.slane %v1679, 3
    %vm1703 = vcmask 1045509
    %v1704 = vsel %vm1703, %v1702, %v1701
    %v1705 = vrot.slane %v1680, 2
    %vm1706 = vcmask 1046534
    %v1707 = vsel %vm1706, %v1705, %v1704
    %v1708 = vrot.slane %v1681, 1
    %vm1709 = vcmask 1047559
    %v1710 = vsel %vm1709, %v1708, %v1707
    %v1711 = vrot.slane %v1683, 7
    %v1712 = vsel %vm1691, %v1711, %v1682
    %v1713 = vrot.slane %v1684, 6
    %v1714 = vsel %vm1694, %v1713, %v1712
    %v1715 = vrot.slane %v1685, 5
    %v1716 = vsel %vm1697, %v1715, %v1714
    %v1717 = vrot.slane %v1686, 4
    %v1718 = vsel %vm1700, %v1717, %v1716
    %v1719 = vrot.slane %v1687, 3
    %v1720 = vsel %vm1703, %v1719, %v1718
    %v1721 = vrot.slane %v1688, 2
    %v1722 = vsel %vm1706, %v1721, %v1720
    %v1723 = vrot.slane %v1689, 1
    %v1724 = vsel %vm1709, %v1723, %v1722
    %v1725 = vpack.c.b16 %v1724, %v1710
    %v1734 = vunpack.c.l.b16 %v1650
    %v1735 = vunpack.c.l.b16 %v1651
    %v1736 = vunpack.c.l.b16 %v1652
    %v1737 = vunpack.c.l.b16 %v1653
    %v1738 = vunpack.c.l.b16 %v1654
    %v1739 = vunpack.c.l.b16 %v1655
    %v1740 = vunpack.c.l.b16 %v1656
    %v1741 = vunpack.c.l.b16 %v1657
    %v1742 = vpack.c.b16 %v1735, %v1734
    %v1743 = vpack.c.b16 %v1737, %v1736
    %v1744 = vpack.c.b16 %v1739, %v1738
    %v1745 = vpack.c.b16 %v1741, %v1740
    %v1751 = vsel %vm897, %v1725, 0
    %1753 = vmatpush.bf16.msra.mxu0 0
    %1754 = vmatpush.bf16.msra.mxu0 0
    %1755 = vmatpush.bf16.msra.mxu0 0
    %1756 = vmatpush.bf16.msra.mxu0 0
    %1757 = vmatpush.bf16.msra.mxu0 %v1745
    %1758 = vmatpush.bf16.msra.mxu0 %v1744
    %1759 = vmatpush.bf16.msra.mxu0 %v1743
    %1760 = vmatpush.bf16.msra.mxu0 %v1742
    %1761 = vmatmul.bf16.gmra.mxu0 %v1751
    %v1762 = vpop.f32.mrf.mxu0
    %v1763 = vadd.f32 0.0, %v1762
    %v1764 = vpop.f32.mrf.mxu0
    %v1765 = vadd.f32 0.0, %v1764
    %1766 = vdwg.mxu0
    %v1783 = vunpack.c.l.b16 %v1610
    %v1784 = vunpack.c.l.b16 %v1611
    %v1785 = vunpack.c.l.b16 %v1612
    %v1786 = vunpack.c.l.b16 %v1613
    %v1787 = vunpack.c.l.b16 %v1614
    %v1788 = vunpack.c.l.b16 %v1615
    %v1789 = vunpack.c.l.b16 %v1616
    %v1790 = vunpack.c.l.b16 %v1617
    %v1791 = vunpack.c.l.b16 %v1618
    %v1792 = vunpack.c.l.b16 %v1619
    %v1793 = vunpack.c.l.b16 %v1620
    %v1794 = vunpack.c.l.b16 %v1621
    %v1795 = vunpack.c.l.b16 %v1622
    %v1796 = vunpack.c.l.b16 %v1623
    %v1797 = vunpack.c.l.b16 %v1624
    %v1798 = vunpack.c.l.b16 %v1625
    %v1799 = vrot.slane %v1784, 7
    %v1800 = vsel %vm1691, %v1799, %v1783
    %v1801 = vrot.slane %v1785, 6
    %v1802 = vsel %vm1694, %v1801, %v1800
    %v1803 = vrot.slane %v1786, 5
    %v1804 = vsel %vm1697, %v1803, %v1802
    %v1805 = vrot.slane %v1787, 4
    %v1806 = vsel %vm1700, %v1805, %v1804
    %v1807 = vrot.slane %v1788, 3
    %v1808 = vsel %vm1703, %v1807, %v1806
    %v1809 = vrot.slane %v1789, 2
    %v1810 = vsel %vm1706, %v1809, %v1808
    %v1811 = vrot.slane %v1790, 1
    %v1812 = vsel %vm1709, %v1811, %v1810
    %v1813 = vrot.slane %v1792, 7
    %v1814 = vsel %vm1691, %v1813, %v1791
    %v1815 = vrot.slane %v1793, 6
    %v1816 = vsel %vm1694, %v1815, %v1814
    %v1817 = vrot.slane %v1794, 5
    %v1818 = vsel %vm1697, %v1817, %v1816
    %v1819 = vrot.slane %v1795, 4
    %v1820 = vsel %vm1700, %v1819, %v1818
    %v1821 = vrot.slane %v1796, 3
    %v1822 = vsel %vm1703, %v1821, %v1820
    %v1823 = vrot.slane %v1797, 2
    %v1824 = vsel %vm1706, %v1823, %v1822
    %v1825 = vrot.slane %v1798, 1
    %v1826 = vsel %vm1709, %v1825, %v1824
    %v1827 = vpack.c.b16 %v1826, %v1812
    %v1836 = vunpack.c.l.b16 %v1626
    %v1837 = vunpack.c.l.b16 %v1627
    %v1838 = vunpack.c.l.b16 %v1628
    %v1839 = vunpack.c.l.b16 %v1629
    %v1840 = vunpack.c.l.b16 %v1630
    %v1841 = vunpack.c.l.b16 %v1631
    %v1842 = vunpack.c.l.b16 %v1632
    %v1843 = vunpack.c.l.b16 %v1633
    %v1844 = vpack.c.b16 %v1837, %v1836
    %v1845 = vpack.c.b16 %v1839, %v1838
    %v1846 = vpack.c.b16 %v1841, %v1840
    %v1847 = vpack.c.b16 %v1843, %v1842
    %v1853 = vsel %vm897, %v1827, 0
    %1855 = vmatpush.bf16.msra.mxu0 0
    %1856 = vmatpush.bf16.msra.mxu0 0
    %1857 = vmatpush.bf16.msra.mxu0 0
    %1858 = vmatpush.bf16.msra.mxu0 0
    %1859 = vmatpush.bf16.msra.mxu0 %v1847
    %1860 = vmatpush.bf16.msra.mxu0 %v1846
    %1861 = vmatpush.bf16.msra.mxu0 %v1845
    %1862 = vmatpush.bf16.msra.mxu0 %v1844
    %1863 = vmatmul.bf16.gmra.mxu0 %v1853
    %v1864 = vpop.f32.mrf.mxu0
    %v1865 = vadd.f32 %v1763, %v1864
    %v1866 = vpop.f32.mrf.mxu0
    %v1867 = vadd.f32 %v1765, %v1866
    %1868 = vdwg.mxu0
    %v1869 = vld [vmem:[%s2] sm:$0xf]
    %v1870 = vld [vmem:[%s2 + $0x4] sm:$0xf]
    %v1871 = vld [vmem:[#allocation10] sm:$0x3]
    %v1874 = vunpack.c.l.b16 %v1869
    %v1875 = vunpack.c.l.b16 %v1870
    %v1876 = vpack.c.b16 %v1875, %v1874
    %vm1877 = vcmask 31744
    %v1879 = vsel %vm1877, %v1876, 0
    %vm1881 = vcmask 1041408
    %v1883 = vsel %vm1881, %v1871, 0
    %1885 = vmatpush.bf16.msra.mxu0 0
    %1886 = vmatpush.bf16.msra.mxu0 0
    %1887 = vmatpush.bf16.msra.mxu0 0
    %1888 = vmatpush.bf16.msra.mxu0 0
    %1889 = vmatpush.bf16.msra.mxu0 0
    %1890 = vmatpush.bf16.msra.mxu0 0
    %1891 = vmatpush.bf16.msra.mxu0 0
    %1892 = vmatpush.bf16.msra.mxu0 %v1883
    %1893 = vmatmul.bf16.gmra.mxu0 %v1879
    %v1894 = vpop.f32.mrf.mxu0
    %v1895 = vadd.f32 0.0, %v1894
    %v1896 = vpop.f32.mrf.mxu0
    %v1897 = vadd.f32 0.0, %v1896
    %1898 = vdwg.mxu0
    %v1899 = vadd.f32 %v1865, %v1895
    %v1900 = vadd.f32 %v1867, %v1897
    %v1901 = vld [vmem:[#allocation2 + $0x2] sm:$0x1]
    %v1902 = vperm.slane %v1901, 0
    %v1903 = vadd.f32 %v1899, %v1902
    %v1904 = vadd.f32 %v1900, %v1902
    %v1905 = vld [vmem:[#allocation2 + $0x3] sm:$0x1]
    %v1906 = vld [vmem:[#allocation2 + $0x4] sm:$0x1]
    %1907 = vadd.xlane.f32.xlu0 %v1903
    %v1908 = vpop.xlane.xlu0 %1907
    %1909 = vadd.xlane.f32.xlu0 %v1904
    %v1910 = vpop.xlane.xlu0 %1909
    %v1911 = vrcp.pop 128.0
    %v1912 = vmul.f32 128.0, %v1911
    %v1913 = vsub.f32 1.0, %v1912
    %v1914 = vmul.f32 %v1911, %v1913
    %v1915 = vadd.f32 %v1911, %v1914
    %vm1916 = vweird.f32 %v1911
    %v1917 = vsel %vm1916, %v1911, %v1915
    %v1918 = vmul.f32 %v1908, %v1917
    %v1919 = vmul.f32 %v1910, %v1917
    %v1920 = vsub.f32 %v1903, %v1918
    %v1921 = vsub.f32 %v1904, %v1919
    %v1922 = vmul.f32 %v1920, %v1920
    %v1923 = vmul.f32 %v1921, %v1921
    %1924 = vadd.xlane.f32.xlu0 %v1922
    %v1925 = vpop.xlane.xlu0 %1924
    %1926 = vadd.xlane.f32.xlu0 %v1923
    %v1927 = vpop.xlane.xlu0 %1926
    %v1928 = vmul.f32 %v1925, %v1917
    %v1929 = vmul.f32 %v1927, %v1917
    %v1930 = vadd.f32 %v1928, 1e-05
    %v1931 = vadd.f32 %v1929, 1e-05
    %v1932 = vrsqrt.pop %v1930
    %v1933 = vmul.f32 %v1932, %v1930
    %v1934 = vmul.f32 %v1933, %v1932
    %v1935 = vmul.f32 0.5, %v1934
    %v1936 = vsub.f32 1.5, %v1935
    %v1937 = vmul.f32 %v1932, %v1936
    %vm1938 = vweird.f32 %v1930
    %vm1939 = vweird.f32 %v1932
    %vm1940 = vmor %vm1938, %vm1939
    %v1941 = vsel %vm1940, %v1932, %v1937
    %v1942 = vrsqrt.pop %v1931
    %v1943 = vmul.f32 %v1942, %v1931
    %v1944 = vmul.f32 %v1943, %v1942
    %v1945 = vmul.f32 0.5, %v1944
    %v1946 = vsub.f32 1.5, %v1945
    %v1947 = vmul.f32 %v1942, %v1946
    %vm1948 = vweird.f32 %v1931
    %vm1949 = vweird.f32 %v1942
    %vm1950 = vmor %vm1948, %vm1949
    %v1951 = vsel %vm1950, %v1942, %v1947
    %v1952 = vmul.f32 %v1920, %v1941
    %v1953 = vmul.f32 %v1921, %v1951
    %v1954 = vperm.slane %v1905, 0
    %v1955 = vmul.f32 %v1952, %v1954
    %v1956 = vmul.f32 %v1953, %v1954
    %v1957 = vperm.slane %v1906, 0
    %v1958 = vadd.f32 %v1955, %v1957
    %v1959 = vadd.f32 %v1956, %v1957
    %v1960 = vld [vmem:[%s3] sm:$0xff]
    %v1961 = vadd.f32 %v1958, %v1960
    %v1962 = vadd.f32 %v1959, %v1960
    %v1963 = vld [vmem:[%s10] sm:$0xff]
    %v1964 = vld [vmem:[%s10 + $0x8] sm:$0xff]
    %v1965 = vld [vmem:[%s10 + $0x10] sm:$0xff]
    %v1966 = vld [vmem:[%s10 + $0x18] sm:$0xff]
    %v1967 = vld [vmem:[%s10 + $0x20] sm:$0xff]
    %v1968 = vld [vmem:[%s10 + $0x28] sm:$0xff]
    %v1969 = vld [vmem:[%s10 + $0x30] sm:$0xff]
    %v1970 = vld [vmem:[%s10 + $0x38] sm:$0xff]
    %v1971 = vld [vmem:[%s10 + $0x40] sm:$0xff]
    %v1972 = vld [vmem:[%s10 + $0x48] sm:$0xff]
    %v1973 = vld [vmem:[%s10 + $0x50] sm:$0xff]
    %v1974 = vld [vmem:[%s10 + $0x58] sm:$0xff]
    %v1975 = vld [vmem:[%s10 + $0x60] sm:$0xff]
    %v1976 = vld [vmem:[%s10 + $0x68] sm:$0xff]
    %v1977 = vld [vmem:[%s10 + $0x70] sm:$0xff]
    %v1978 = vld [vmem:[%s10 + $0x78] sm:$0xff]
    %v1979 = vld [vmem:[#allocation2 + $0x5] sm:$0x1]
    %v1980 = vperm.slane %v1979, 0
    %1981 = vmatpush.msra.mxu0 %v1978
    %1982 = vmatpush.msra.mxu0 %v1977
    %1983 = vmatpush.msra.mxu0 %v1976
    %1984 = vmatpush.msra.mxu0 %v1975
    %1985 = vmatpush.msra.mxu0 %v1974
    %1986 = vmatpush.msra.mxu0 %v1973
    %1987 = vmatpush.msra.mxu0 %v1972
    %1988 = vmatpush.msra.mxu0 %v1971
    %1989 = vmatpush.msra.mxu0 %v1970
    %1990 = vmatpush.msra.mxu0 %v1969
    %1991 = vmatpush.msra.mxu0 %v1968
    %1992 = vmatpush.msra.mxu0 %v1967
    %1993 = vmatpush.msra.mxu0 %v1966
    %1994 = vmatpush.msra.mxu0 %v1965
    %1995 = vmatpush.msra.mxu0 %v1964
    %1996 = vmatpush.msra.mxu0 %v1963
    %1997 = vmatmul.f32.gmra.mxu0 %v1961
    %v1998 = vpop.f32.mrf.mxu0
    %v1999 = vadd.f32 %v1980, %v1998
    %2000 = vmatmul.f32.gmra.mxu0 %v1962
    %v2001 = vpop.f32.mrf.mxu0
    %v2002 = vadd.f32 %v1980, %v2001
    %2003 = vdwg.mxu0
    %v2004 = vsel %vm1877, %v1999, -inf
    %v2005 = vrot.slane %v2004, 4
    %v2006 = vmax.f32 %v2004, %v2005
    %v2007 = vrot.slane %v2006, 2
    %v2008 = vmax.f32 %v2006, %v2007
    %v2009 = vrot.slane %v2008, 1
    %v2010 = vmax.f32 %v2008, %v2009
    %v2011 = vsel %vm1877, %v2002, -inf
    %v2012 = vrot.slane %v2011, 4
    %v2013 = vmax.f32 %v2011, %v2012
    %v2014 = vrot.slane %v2013, 2
    %v2015 = vmax.f32 %v2013, %v2014
    %v2016 = vrot.slane %v2015, 1
    %v2017 = vmax.f32 %v2015, %v2016
    %v2018 = vsub.f32 %v1999, %v2010
    %v2019 = vsub.f32 %v2002, %v2017
    %v2020 = vmul.f32 %v2018, 1.442695
    %v2021 = vpow.pop %v2020
    %v2022 = vmul.f32 %v2019, 1.442695
    %v2023 = vpow.pop %v2022
    %v2024 = vsel %vm1877, %v2021, 0.0
    %v2025 = vrot.slane %v2024, 4
    %v2026 = vadd.f32 %v2024, %v2025
    %v2027 = vrot.slane %v2026, 2
    %v2028 = vadd.f32 %v2026, %v2027
    %v2029 = vrot.slane %v2028, 1
    %v2030 = vadd.f32 %v2028, %v2029
    %v2031 = vsel %vm1877, %v2023, 0.0
    %v2032 = vrot.slane %v2031, 4
    %v2033 = vadd.f32 %v2031, %v2032
    %v2034 = vrot.slane %v2033, 2
    %v2035 = vadd.f32 %v2033, %v2034
    %v2036 = vrot.slane %v2035, 1
    %v2037 = vadd.f32 %v2035, %v2036
    %v2038 = vrcp.pop %v2030
    %v2039 = vrcp.pop %v2037
    %v2040 = vmul.f32 %v2021, %v2038
    %v2041 = vmul.f32 %v2023, %v2039
    %2042 = vxpose.xlu0.b32.start [1/16] %v2040, 128
    %2043 = vxpose.xlu0.b32.cont [2/16] 0.0, 128
    %2044 = vxpose.xlu0.b32.cont [3/16] 0.0, 128
    %2045 = vxpose.xlu0.b32.cont [4/16] 0.0, 128
    %2046 = vxpose.xlu0.b32.cont [5/16] 0.0, 128
    %2047 = vxpose.xlu0.b32.cont [6/16] 0.0, 128
    %2048 = vxpose.xlu0.b32.cont [7/16] 0.0, 128
    %2049 = vxpose.xlu0.b32.cont [8/16] 0.0, 128
    %2050 = vxpose.xlu0.b32.cont [9/16] 0.0, 128
    %2051 = vxpose.xlu0.b32.cont [10/16] 0.0, 128
    %2052 = vxpose.xlu0.b32.cont [11/16] 0.0, 128
    %2053 = vxpose.xlu0.b32.cont [12/16] 0.0, 128
    %2054 = vxpose.xlu0.b32.cont [13/16] 0.0, 128
    %2055 = vxpose.xlu0.b32.cont [14/16] 0.0, 128
    %2056 = vxpose.xlu0.b32.cont [15/16] 0.0, 128
    %2057 = vxpose.xlu0.b32.end [16/16] 0.0, 128
    %v2058 = vpop.trf.xlu0
    %v2059 = vpop.trf.xlu0
    %v2060 = vpop.trf.xlu0
    %v2061 = vpop.trf.xlu0
    %v2062 = vpop.trf.xlu0
    %v2063 = vpop.trf.xlu0
    %v2064 = vpop.trf.xlu0
    %v2065 = vpop.trf.xlu0
    %v2066 = vpop.trf.xlu0
    %v2067 = vpop.trf.xlu0
    %v2068 = vpop.trf.xlu0
    %v2069 = vpop.trf.xlu0
    %v2070 = vpop.trf.xlu0
    %v2071 = vpop.trf.xlu0
    %v2072 = vpop.trf.xlu0
    %v2073 = vpop.trf.xlu0
    %2074 = vxpose.xlu0.b32.start [1/16] %v2041, 128
    %2075 = vxpose.xlu0.b32.cont [2/16] 0.0, 128
    %2076 = vxpose.xlu0.b32.cont [3/16] 0.0, 128
    %2077 = vxpose.xlu0.b32.cont [4/16] 0.0, 128
    %2078 = vxpose.xlu0.b32.cont [5/16] 0.0, 128
    %2079 = vxpose.xlu0.b32.cont [6/16] 0.0, 128
    %2080 = vxpose.xlu0.b32.cont [7/16] 0.0, 128
    %2081 = vxpose.xlu0.b32.cont [8/16] 0.0, 128
    %2082 = vxpose.xlu0.b32.cont [9/16] 0.0, 128
    %2083 = vxpose.xlu0.b32.cont [10/16] 0.0, 128
    %2084 = vxpose.xlu0.b32.cont [11/16] 0.0, 128
    %2085 = vxpose.xlu0.b32.cont [12/16] 0.0, 128
    %2086 = vxpose.xlu0.b32.cont [13/16] 0.0, 128
    %2087 = vxpose.xlu0.b32.cont [14/16] 0.0, 128
    %2088 = vxpose.xlu0.b32.cont [15/16] 0.0, 128
    %2089 = vxpose.xlu0.b32.end [16/16] 0.0, 128
    %v2090 = vpop.trf.xlu0
    %v2091 = vpop.trf.xlu0
    %v2092 = vpop.trf.xlu0
    %v2093 = vpop.trf.xlu0
    %v2094 = vpop.trf.xlu0
    %v2095 = vpop.trf.xlu0
    %v2096 = vpop.trf.xlu0
    %v2097 = vpop.trf.xlu0
    %v2098 = vpop.trf.xlu0
    %v2099 = vpop.trf.xlu0
    %v2100 = vpop.trf.xlu0
    %v2101 = vpop.trf.xlu0
    %v2102 = vpop.trf.xlu0
    %v2103 = vpop.trf.xlu0
    %v2104 = vpop.trf.xlu0
    %v2105 = vpop.trf.xlu0
    %vm2106 = vcmask 64512
    %v2108 = vsel %vm2106, %v2058, 0
    %2110 = vmatpush.msra.mxu0 0.0
    %2111 = vmatpush.msra.mxu0 0.0
    %2112 = vmatpush.msra.mxu0 0.0
    %2113 = vmatpush.msra.mxu0 0.0
    %2114 = vmatpush.msra.mxu0 0.0
    %2115 = vmatpush.msra.mxu0 0.0
    %2116 = vmatpush.msra.mxu0 0.0
    %2117 = vmatpush.msra.mxu0 0.0
    %2118 = vmatpush.msra.mxu0 0.0
    %2119 = vmatpush.msra.mxu0 0.0
    %2120 = vmatpush.msra.mxu0 0.0
    %2121 = vmatpush.msra.mxu0 0.0
    %2122 = vmatpush.msra.mxu0 0.0
    %2123 = vmatpush.msra.mxu0 0.0
    %2124 = vmatpush.msra.mxu0 0.0
    %2125 = vmatpush.msra.mxu0 %v1961
    %2126 = vmatmul.f32.gmra.mxu0 %v2108
    %v2127 = vpop.f32.mrf.mxu0
    %v2128 = vadd.f32 0.0, %v2127
    %2129 = vdwg.mxu0
    %v2131 = vsel %vm2106, %v2090, 0
    %2133 = vmatpush.msra.mxu0 0.0
    %2134 = vmatpush.msra.mxu0 0.0
    %2135 = vmatpush.msra.mxu0 0.0
    %2136 = vmatpush.msra.mxu0 0.0
    %2137 = vmatpush.msra.mxu0 0.0
    %2138 = vmatpush.msra.mxu0 0.0
    %2139 = vmatpush.msra.mxu0 0.0
    %2140 = vmatpush.msra.mxu0 0.0
    %2141 = vmatpush.msra.mxu0 0.0
    %2142 = vmatpush.msra.mxu0 0.0
    %2143 = vmatpush.msra.mxu0 0.0
    %2144 = vmatpush.msra.mxu0 0.0
    %2145 = vmatpush.msra.mxu0 0.0
    %2146 = vmatpush.msra.mxu0 0.0
    %2147 = vmatpush.msra.mxu0 0.0
    %2148 = vmatpush.msra.mxu0 %v1962
    %2149 = vmatmul.f32.gmra.mxu0 %v2131
    %v2150 = vpop.f32.mrf.mxu0
    %v2151 = vadd.f32 0.0, %v2150
    %2152 = vdwg.mxu0
    %v2153 = vpack.c.bf16 %v2128, %v2128
    %v2154 = vpack.c.bf16 %v2151, %v2151
    %v2155 = vld [vmem:[%s11] sm:$0xf]
    %v2156 = vld [vmem:[%s11 + $0x4] sm:$0xf]
    %v2157 = vld [vmem:[%s11 + $0x8] sm:$0xf]
    %v2158 = vld [vmem:[%s11 + $0xc] sm:$0xf]
    %v2159 = vld [vmem:[%s11 + $0x10] sm:$0xf]
    %v2160 = vld [vmem:[%s11 + $0x14] sm:$0xf]
    %v2161 = vld [vmem:[%s11 + $0x18] sm:$0xf]
    %v2162 = vld [vmem:[%s11 + $0x1c] sm:$0xf]
    %v2163 = vld [vmem:[%s11 + $0x20] sm:$0xf]
    %v2164 = vld [vmem:[%s11 + $0x24] sm:$0xf]
    %v2165 = vld [vmem:[%s11 + $0x28] sm:$0xf]
    %v2166 = vld [vmem:[%s11 + $0x2c] sm:$0xf]
    %v2167 = vld [vmem:[%s11 + $0x30] sm:$0xf]
    %v2168 = vld [vmem:[%s11 + $0x34] sm:$0xf]
    %v2169 = vld [vmem:[%s11 + $0x38] sm:$0xf]
    %v2170 = vld [vmem:[%s11 + $0x3c] sm:$0xf]
    %v2171 = vld [vmem:[%s11 + $0x40] sm:$0xf]
    %v2172 = vld [vmem:[%s11 + $0x44] sm:$0xf]
    %v2173 = vld [vmem:[%s11 + $0x48] sm:$0xf]
    %v2174 = vld [vmem:[%s11 + $0x4c] sm:$0xf]
    %v2175 = vld [vmem:[%s11 + $0x50] sm:$0xf]
    %v2176 = vld [vmem:[%s11 + $0x54] sm:$0xf]
    %v2177 = vld [vmem:[%s11 + $0x58] sm:$0xf]
    %v2178 = vld [vmem:[%s11 + $0x5c] sm:$0xf]
    %v2179 = vld [vmem:[%s11 + $0x60] sm:$0xf]
    %v2180 = vld [vmem:[%s11 + $0x64] sm:$0xf]
    %v2181 = vld [vmem:[%s11 + $0x68] sm:$0xf]
    %v2182 = vld [vmem:[%s11 + $0x6c] sm:$0xf]
    %v2183 = vld [vmem:[%s11 + $0x70] sm:$0xf]
    %v2184 = vld [vmem:[%s11 + $0x74] sm:$0xf]
    %v2185 = vld [vmem:[%s11 + $0x78] sm:$0xf]
    %v2186 = vld [vmem:[%s11 + $0x7c] sm:$0xf]
    %v2189 = vunpack.c.l.b16 %v2153
    %v2190 = vunpack.c.l.b16 %v2154
    %v2191 = vrot.slane %v2189, 1
    %v2192 = vsel %vm1691, %v2190, %v2191
    %v2193 = vpack.c.b16 %v2192, %v2192
    %v2211 = vunpack.c.l.b16 %v2171
    %v2212 = vunpack.c.l.b16 %v2172
    %v2213 = vunpack.c.l.b16 %v2173
    %v2214 = vunpack.c.l.b16 %v2174
    %v2215 = vunpack.c.l.b16 %v2175
    %v2216 = vunpack.c.l.b16 %v2176
    %v2217 = vunpack.c.l.b16 %v2177
    %v2218 = vunpack.c.l.b16 %v2178
    %v2219 = vunpack.c.l.b16 %v2179
    %v2220 = vunpack.c.l.b16 %v2180
    %v2221 = vunpack.c.l.b16 %v2181
    %v2222 = vunpack.c.l.b16 %v2182
    %v2223 = vunpack.c.l.b16 %v2183
    %v2224 = vunpack.c.l.b16 %v2184
    %v2225 = vunpack.c.l.b16 %v2185
    %v2226 = vunpack.c.l.b16 %v2186
    %v2227 = vpack.c.b16 %v2212, %v2211
    %v2228 = vpack.c.b16 %v2214, %v2213
    %v2229 = vpack.c.b16 %v2216, %v2215
    %v2230 = vpack.c.b16 %v2218, %v2217
    %v2231 = vpack.c.b16 %v2220, %v2219
    %v2232 = vpack.c.b16 %v2222, %v2221
    %v2233 = vpack.c.b16 %v2224, %v2223
    %v2234 = vpack.c.b16 %v2226, %v2225
    %2243 = vmatpush.bf16.msra.mxu0 %v2234
    %2244 = vmatpush.bf16.msra.mxu0 %v2233
    %2245 = vmatpush.bf16.msra.mxu0 %v2232
    %2246 = vmatpush.bf16.msra.mxu0 %v2231
    %2247 = vmatpush.bf16.msra.mxu0 %v2230
    %2248 = vmatpush.bf16.msra.mxu0 %v2229
    %2249 = vmatpush.bf16.msra.mxu0 %v2228
    %2250 = vmatpush.bf16.msra.mxu0 %v2227
    %2251 = vmatmul.bf16.gmra.mxu0 %v2193
    %v2252 = vpop.f32.mrf.mxu0
    %v2253 = vadd.f32 0.0, %v2252
    %v2254 = vpop.f32.mrf.mxu0
    %2255 = vdwg.mxu0
    %v2256 = vrot.slane %v2190, 7
    %v2257 = vsel %vm1691, %v2256, %v2189
    %v2258 = vpack.c.b16 %v2257, %v2257
    %v2276 = vunpack.c.l.b16 %v2155
    %v2277 = vunpack.c.l.b16 %v2156
    %v2278 = vunpack.c.l.b16 %v2157
    %v2279 = vunpack.c.l.b16 %v2158
    %v2280 = vunpack.c.l.b16 %v2159
    %v2281 = vunpack.c.l.b16 %v2160
    %v2282 = vunpack.c.l.b16 %v2161
    %v2283 = vunpack.c.l.b16 %v2162
    %v2284 = vunpack.c.l.b16 %v2163
    %v2285 = vunpack.c.l.b16 %v2164
    %v2286 = vunpack.c.l.b16 %v2165
    %v2287 = vunpack.c.l.b16 %v2166
    %v2288 = vunpack.c.l.b16 %v2167
    %v2289 = vunpack.c.l.b16 %v2168
    %v2290 = vunpack.c.l.b16 %v2169
    %v2291 = vunpack.c.l.b16 %v2170
    %v2292 = vpack.c.b16 %v2277, %v2276
    %v2293 = vpack.c.b16 %v2279, %v2278
    %v2294 = vpack.c.b16 %v2281, %v2280
    %v2295 = vpack.c.b16 %v2283, %v2282
    %v2296 = vpack.c.b16 %v2285, %v2284
    %v2297 = vpack.c.b16 %v2287, %v2286
    %v2298 = vpack.c.b16 %v2289, %v2288
    %v2299 = vpack.c.b16 %v2291, %v2290
    %2308 = vmatpush.bf16.msra.mxu0 %v2299
    %2309 = vmatpush.bf16.msra.mxu0 %v2298
    %2310 = vmatpush.bf16.msra.mxu0 %v2297
    %2311 = vmatpush.bf16.msra.mxu0 %v2296
    %2312 = vmatpush.bf16.msra.mxu0 %v2295
    %2313 = vmatpush.bf16.msra.mxu0 %v2294
    %2314 = vmatpush.bf16.msra.mxu0 %v2293
    %2315 = vmatpush.bf16.msra.mxu0 %v2292
    %2316 = vmatmul.bf16.gmra.mxu0 %v2258
    %v2317 = vpop.f32.mrf.mxu0
    %v2318 = vadd.f32 %v2253, %v2317
    %v2319 = vpop.f32.mrf.mxu0
    %2320 = vdwg.mxu0
    %v2321 = vld [vmem:[%s11 + $0x80] sm:$0xf]
    %v2322 = vld [vmem:[%s11 + $0x84] sm:$0xf]
    %v2323 = vld [vmem:[%s11 + $0x88] sm:$0xf]
    %v2324 = vld [vmem:[%s11 + $0x8c] sm:$0xf]
    %v2325 = vld [vmem:[%s11 + $0x90] sm:$0xf]
    %v2326 = vld [vmem:[%s11 + $0x94] sm:$0xf]
    %v2327 = vld [vmem:[%s11 + $0x98] sm:$0xf]
    %v2328 = vld [vmem:[%s11 + $0x9c] sm:$0xf]
    %v2329 = vld [vmem:[%s11 + $0xa0] sm:$0xf]
    %v2330 = vld [vmem:[%s11 + $0xa4] sm:$0xf]
    %v2331 = vld [vmem:[%s11 + $0xa8] sm:$0xf]
    %v2332 = vld [vmem:[%s11 + $0xac] sm:$0xf]
    %v2333 = vld [vmem:[%s11 + $0xb0] sm:$0xf]
    %v2334 = vld [vmem:[%s11 + $0xb4] sm:$0xf]
    %v2335 = vld [vmem:[%s11 + $0xb8] sm:$0xf]
    %v2336 = vld [vmem:[%s11 + $0xbc] sm:$0xf]
    %v2337 = vrot.slane %v2189, 2
    %v2338 = vrot.slane %v2190, 1
    %v2339 = vsel %vm1691, %v2338, %v2337
    %v2340 = vpack.c.b16 %v2339, %v2339
    %v2358 = vunpack.c.l.b16 %v2321
    %v2359 = vunpack.c.l.b16 %v2322
    %v2360 = vunpack.c.l.b16 %v2323
    %v2361 = vunpack.c.l.b16 %v2324
    %v2362 = vunpack.c.l.b16 %v2325
    %v2363 = vunpack.c.l.b16 %v2326
    %v2364 = vunpack.c.l.b16 %v2327
    %v2365 = vunpack.c.l.b16 %v2328
    %v2366 = vunpack.c.l.b16 %v2329
    %v2367 = vunpack.c.l.b16 %v2330
    %v2368 = vunpack.c.l.b16 %v2331
    %v2369 = vunpack.c.l.b16 %v2332
    %v2370 = vunpack.c.l.b16 %v2333
    %v2371 = vunpack.c.l.b16 %v2334
    %v2372 = vunpack.c.l.b16 %v2335
    %v2373 = vunpack.c.l.b16 %v2336
    %v2374 = vpack.c.b16 %v2359, %v2358
    %v2375 = vpack.c.b16 %v2361, %v2360
    %v2376 = vpack.c.b16 %v2363, %v2362
    %v2377 = vpack.c.b16 %v2365, %v2364
    %v2378 = vpack.c.b16 %v2367, %v2366
    %v2379 = vpack.c.b16 %v2369, %v2368
    %v2380 = vpack.c.b16 %v2371, %v2370
    %v2381 = vpack.c.b16 %v2373, %v2372
    %2390 = vmatpush.bf16.msra.mxu0 %v2381
    %2391 = vmatpush.bf16.msra.mxu0 %v2380
    %2392 = vmatpush.bf16.msra.mxu0 %v2379
    %2393 = vmatpush.bf16.msra.mxu0 %v2378
    %2394 = vmatpush.bf16.msra.mxu0 %v2377
    %2395 = vmatpush.bf16.msra.mxu0 %v2376
    %2396 = vmatpush.bf16.msra.mxu0 %v2375
    %2397 = vmatpush.bf16.msra.mxu0 %v2374
    %2398 = vmatmul.bf16.gmra.mxu0 %v2340
    %v2399 = vpop.f32.mrf.mxu0
    %v2400 = vadd.f32 0.0, %v2399
    %v2401 = vpop.f32.mrf.mxu0
    %2402 = vdwg.mxu0
    %v2403 = vadd.f32 %v2318, %v2400
    %v2404 = vld [vmem:[%s11 + $0xc0] sm:$0xf]
    %v2405 = vld [vmem:[%s11 + $0xc4] sm:$0xf]
    %v2406 = vld [vmem:[%s11 + $0xc8] sm:$0xf]
    %v2407 = vld [vmem:[%s11 + $0xcc] sm:$0xf]
    %v2408 = vld [vmem:[%s11 + $0xd0] sm:$0xf]
    %v2409 = vld [vmem:[%s11 + $0xd4] sm:$0xf]
    %v2410 = vld [vmem:[%s11 + $0xd8] sm:$0xf]
    %v2411 = vld [vmem:[%s11 + $0xdc] sm:$0xf]
    %v2412 = vld [vmem:[%s11 + $0xe0] sm:$0xf]
    %v2413 = vld [vmem:[%s11 + $0xe4] sm:$0xf]
    %v2414 = vld [vmem:[%s11 + $0xe8] sm:$0xf]
    %v2415 = vld [vmem:[%s11 + $0xec] sm:$0xf]
    %v2416 = vld [vmem:[%s11 + $0xf0] sm:$0xf]
    %v2417 = vld [vmem:[%s11 + $0xf4] sm:$0xf]
    %v2418 = vld [vmem:[%s11 + $0xf8] sm:$0xf]
    %v2419 = vld [vmem:[%s11 + $0xfc] sm:$0xf]
    %v2420 = vrot.slane %v2189, 3
    %v2421 = vrot.slane %v2190, 2
    %v2422 = vsel %vm1691, %v2421, %v2420
    %v2423 = vpack.c.b16 %v2422, %v2422
    %v2441 = vunpack.c.l.b16 %v2404
    %v2442 = vunpack.c.l.b16 %v2405
    %v2443 = vunpack.c.l.b16 %v2406
    %v2444 = vunpack.c.l.b16 %v2407
    %v2445 = vunpack.c.l.b16 %v2408
    %v2446 = vunpack.c.l.b16 %v2409
    %v2447 = vunpack.c.l.b16 %v2410
    %v2448 = vunpack.c.l.b16 %v2411
    %v2449 = vunpack.c.l.b16 %v2412
    %v2450 = vunpack.c.l.b16 %v2413
    %v2451 = vunpack.c.l.b16 %v2414
    %v2452 = vunpack.c.l.b16 %v2415
    %v2453 = vunpack.c.l.b16 %v2416
    %v2454 = vunpack.c.l.b16 %v2417
    %v2455 = vunpack.c.l.b16 %v2418
    %v2456 = vunpack.c.l.b16 %v2419
    %v2457 = vpack.c.b16 %v2442, %v2441
    %v2458 = vpack.c.b16 %v2444, %v2443
    %v2459 = vpack.c.b16 %v2446, %v2445
    %v2460 = vpack.c.b16 %v2448, %v2447
    %v2461 = vpack.c.b16 %v2450, %v2449
    %v2462 = vpack.c.b16 %v2452, %v2451
    %v2463 = vpack.c.b16 %v2454, %v2453
    %v2464 = vpack.c.b16 %v2456, %v2455
    %2473 = vmatpush.bf16.msra.mxu0 %v2464
    %2474 = vmatpush.bf16.msra.mxu0 %v2463
    %2475 = vmatpush.bf16.msra.mxu0 %v2462
    %2476 = vmatpush.bf16.msra.mxu0 %v2461
    %2477 = vmatpush.bf16.msra.mxu0 %v2460
    %2478 = vmatpush.bf16.msra.mxu0 %v2459
    %2479 = vmatpush.bf16.msra.mxu0 %v2458
    %2480 = vmatpush.bf16.msra.mxu0 %v2457
    %2481 = vmatmul.bf16.gmra.mxu0 %v2423
    %v2482 = vpop.f32.mrf.mxu0
    %v2483 = vadd.f32 0.0, %v2482
    %v2484 = vpop.f32.mrf.mxu0
    %2485 = vdwg.mxu0
    %v2486 = vadd.f32 %v2403, %v2483
    %v2487 = vld [vmem:[#allocation2 + $0x6] sm:$0x1]
    %v2488 = vperm.slane %v2487, 0
    %v2489 = vadd.f32 %v2486, %v2488
    %v2490 = vmax.f32 %v2489, 0.0
    %v2491 = vpack.c.bf16 %v2490, %v2490
    %v2492 = vld [vmem:[%s12] sm:$0xf]
    %v2493 = vld [vmem:[%s12 + $0x4] sm:$0xf]
    %v2494 = vld [vmem:[%s12 + $0x8] sm:$0xf]
    %v2495 = vld [vmem:[%s12 + $0xc] sm:$0xf]
    %v2496 = vld [vmem:[%s12 + $0x10] sm:$0xf]
    %v2497 = vld [vmem:[%s12 + $0x14] sm:$0xf]
    %v2498 = vld [vmem:[%s12 + $0x18] sm:$0xf]
    %v2499 = vld [vmem:[%s12 + $0x1c] sm:$0xf]
    %v2500 = vld [vmem:[%s12 + $0x20] sm:$0xf]
    %v2501 = vld [vmem:[%s12 + $0x24] sm:$0xf]
    %v2502 = vld [vmem:[%s12 + $0x28] sm:$0xf]
    %v2503 = vld [vmem:[%s12 + $0x2c] sm:$0xf]
    %v2504 = vld [vmem:[%s12 + $0x30] sm:$0xf]
    %v2505 = vld [vmem:[%s12 + $0x34] sm:$0xf]
    %v2506 = vld [vmem:[%s12 + $0x38] sm:$0xf]
    %v2507 = vld [vmem:[%s12 + $0x3c] sm:$0xf]
    %v2508 = vld [vmem:[#allocation2 + $0x7] sm:$0x1]
    %v2509 = vperm.slane %v2508, 0
    %v2526 = vunpack.c.l.b16 %v2492
    %v2527 = vunpack.c.l.b16 %v2493
    %v2528 = vunpack.c.l.b16 %v2494
    %v2529 = vunpack.c.l.b16 %v2495
    %v2530 = vunpack.c.l.b16 %v2496
    %v2531 = vunpack.c.l.b16 %v2497
    %v2532 = vunpack.c.l.b16 %v2498
    %v2533 = vunpack.c.l.b16 %v2499
    %v2534 = vunpack.c.l.b16 %v2500
    %v2535 = vunpack.c.l.b16 %v2501
    %v2536 = vunpack.c.l.b16 %v2502
    %v2537 = vunpack.c.l.b16 %v2503
    %v2538 = vunpack.c.l.b16 %v2504
    %v2539 = vunpack.c.l.b16 %v2505
    %v2540 = vunpack.c.l.b16 %v2506
    %v2541 = vunpack.c.l.b16 %v2507
    %v2542 = vpack.c.b16 %v2527, %v2526
    %v2543 = vpack.c.b16 %v2529, %v2528
    %v2544 = vpack.c.b16 %v2531, %v2530
    %v2545 = vpack.c.b16 %v2533, %v2532
    %v2546 = vpack.c.b16 %v2535, %v2534
    %v2547 = vpack.c.b16 %v2537, %v2536
    %v2548 = vpack.c.b16 %v2539, %v2538
    %v2549 = vpack.c.b16 %v2541, %v2540
    %2558 = vmatpush.bf16.msra.mxu0 %v2549
    %2559 = vmatpush.bf16.msra.mxu0 %v2548
    %2560 = vmatpush.bf16.msra.mxu0 %v2547
    %2561 = vmatpush.bf16.msra.mxu0 %v2546
    %2562 = vmatpush.bf16.msra.mxu0 %v2545
    %2563 = vmatpush.bf16.msra.mxu0 %v2544
    %2564 = vmatpush.bf16.msra.mxu0 %v2543
    %2565 = vmatpush.bf16.msra.mxu0 %v2542
    %2566 = vmatmul.bf16.gmra.mxu0 %v2491
    %v2567 = vpop.f32.mrf.mxu0
    %v2568 = vadd.f32 %v2509, %v2567
    %v2569 = vpop.f32.mrf.mxu0
    %2570 = vdwg.mxu0
    %v2571 = vmax.f32 %v2568, 0.0
    %v2572 = vld [vmem:[#allocation2 + $0x8] sm:$0x1]
    %v2573 = vld [vmem:[#allocation2 + $0x9] sm:$0x1]
    %v2574 = vsel %vm1881, %v2571, 0.0
    %2575 = vadd.xlane.f32.xlu0 %v2574
    %v2576 = vpop.xlane.xlu0 %2575
    %v2577 = vmul.f32 %v2576, %v1917
    %v2578 = vsub.f32 %v2571, %v2577
    %v2579 = vmul.f32 %v2578, %v2578
    %v2580 = vsel %vm1881, %v2579, 0.0
    %2581 = vadd.xlane.f32.xlu0 %v2580
    %v2582 = vpop.xlane.xlu0 %2581
    %v2583 = vmul.f32 %v2582, %v1917
    %v2584 = vadd.f32 %v2583, 1e-05
    %v2585 = vrsqrt.pop %v2584
    %v2586 = vmul.f32 %v2585, %v2584
    %v2587 = vmul.f32 %v2586, %v2585
    %v2588 = vmul.f32 0.5, %v2587
    %v2589 = vsub.f32 1.5, %v2588
    %v2590 = vmul.f32 %v2585, %v2589
    %vm2591 = vweird.f32 %v2584
    %vm2592 = vweird.f32 %v2585
    %vm2593 = vmor %vm2591, %vm2592
    %v2594 = vsel %vm2593, %v2585, %v2590
    %v2595 = vmul.f32 %v2578, %v2594
    %v2596 = vperm.slane %v2572, 0
    %v2597 = vmul.f32 %v2595, %v2596
    %v2598 = vperm.slane %v2573, 0
    %v2599 = vadd.f32 %v2597, %v2598
    %v2600 = vpack.c.bf16 %v2599, %v2599
    %v2601 = vld [vmem:[%s13] sm:$0xf]
    %v2602 = vld [vmem:[%s13 + $0x4] sm:$0xf]
    %v2603 = vld [vmem:[%s13 + $0x8] sm:$0xf]
    %v2604 = vld [vmem:[%s13 + $0xc] sm:$0xf]
    %v2605 = vld [vmem:[%s13 + $0x10] sm:$0xf]
    %v2606 = vld [vmem:[%s13 + $0x14] sm:$0xf]
    %v2607 = vld [vmem:[%s13 + $0x18] sm:$0xf]
    %v2608 = vld [vmem:[%s13 + $0x1c] sm:$0xf]
    %v2609 = vld [vmem:[%s13 + $0x20] sm:$0xf]
    %v2610 = vld [vmem:[%s13 + $0x24] sm:$0xf]
    %v2611 = vld [vmem:[%s13 + $0x28] sm:$0xf]
    %v2612 = vld [vmem:[%s13 + $0x2c] sm:$0xf]
    %v2613 = vld [vmem:[%s13 + $0x30] sm:$0xf]
    %v2614 = vld [vmem:[%s13 + $0x34] sm:$0xf]
    %v2615 = vld [vmem:[%s13 + $0x38] sm:$0xf]
    %v2616 = vld [vmem:[%s13 + $0x3c] sm:$0xf]
    %v2617 = vld [vmem:[#allocation2 + $0xa] sm:$0x1]
    %v2618 = vperm.slane %v2617, 0
    %v2635 = vunpack.c.l.b16 %v2601
    %v2636 = vunpack.c.l.b16 %v2602
    %v2637 = vunpack.c.l.b16 %v2603
    %v2638 = vunpack.c.l.b16 %v2604
    %v2639 = vunpack.c.l.b16 %v2605
    %v2640 = vunpack.c.l.b16 %v2606
    %v2641 = vunpack.c.l.b16 %v2607
    %v2642 = vunpack.c.l.b16 %v2608
    %v2643 = vunpack.c.l.b16 %v2609
    %v2644 = vunpack.c.l.b16 %v2610
    %v2645 = vunpack.c.l.b16 %v2611
    %v2646 = vunpack.c.l.b16 %v2612
    %v2647 = vunpack.c.l.b16 %v2613
    %v2648 = vunpack.c.l.b16 %v2614
    %v2649 = vunpack.c.l.b16 %v2615
    %v2650 = vunpack.c.l.b16 %v2616
    %v2651 = vpack.c.b16 %v2636, %v2635
    %v2652 = vpack.c.b16 %v2638, %v2637
    %v2653 = vpack.c.b16 %v2640, %v2639
    %v2654 = vpack.c.b16 %v2642, %v2641
    %v2655 = vpack.c.b16 %v2644, %v2643
    %v2656 = vpack.c.b16 %v2646, %v2645
    %v2657 = vpack.c.b16 %v2648, %v2647
    %v2658 = vpack.c.b16 %v2650, %v2649
    %2667 = vmatpush.bf16.msra.mxu0 %v2658
    %2668 = vmatpush.bf16.msra.mxu0 %v2657
    %2669 = vmatpush.bf16.msra.mxu0 %v2656
    %2670 = vmatpush.bf16.msra.mxu0 %v2655
    %2671 = vmatpush.bf16.msra.mxu0 %v2654
    %2672 = vmatpush.bf16.msra.mxu0 %v2653
    %2673 = vmatpush.bf16.msra.mxu0 %v2652
    %2674 = vmatpush.bf16.msra.mxu0 %v2651
    %2675 = vmatmul.bf16.gmra.mxu0 %v2600
    %v2676 = vpop.f32.mrf.mxu0
    %v2677 = vadd.f32 %v2618, %v2676
    %v2678 = vpop.f32.mrf.mxu0
    %2679 = vdwg.mxu0
    %v2680 = vmax.f32 %v2677, 0.0
    %v2681 = vpack.c.bf16 %v2680, %v2680
    %v2682 = vld [vmem:[%s14] sm:$0xf]
    %v2683 = vld [vmem:[%s14 + $0x4] sm:$0xf]
    %v2684 = vld [vmem:[%s14 + $0x8] sm:$0xf]
    %v2685 = vld [vmem:[%s14 + $0xc] sm:$0xf]
    %v2686 = vld [vmem:[%s14 + $0x10] sm:$0xf]
    %v2687 = vld [vmem:[%s14 + $0x14] sm:$0xf]
    %v2688 = vld [vmem:[%s14 + $0x18] sm:$0xf]
    %v2689 = vld [vmem:[%s14 + $0x1c] sm:$0xf]
    %v2690 = vld [vmem:[#allocation2 + $0xb] sm:$0x1]
    %v2691 = vperm.slane %v2690, 0
    %v2700 = vunpack.c.l.b16 %v2682
    %v2701 = vunpack.c.l.b16 %v2683
    %v2702 = vunpack.c.l.b16 %v2684
    %v2703 = vunpack.c.l.b16 %v2685
    %v2704 = vunpack.c.l.b16 %v2686
    %v2705 = vunpack.c.l.b16 %v2687
    %v2706 = vunpack.c.l.b16 %v2688
    %v2707 = vunpack.c.l.b16 %v2689
    %v2708 = vpack.c.b16 %v2701, %v2700
    %v2709 = vpack.c.b16 %v2703, %v2702
    %v2710 = vpack.c.b16 %v2705, %v2704
    %v2711 = vpack.c.b16 %v2707, %v2706
    %v2717 = vsel %vm897, %v2681, 0
    %2719 = vmatpush.bf16.msra.mxu0 0
    %2720 = vmatpush.bf16.msra.mxu0 0
    %2721 = vmatpush.bf16.msra.mxu0 0
    %2722 = vmatpush.bf16.msra.mxu0 0
    %2723 = vmatpush.bf16.msra.mxu0 %v2711
    %2724 = vmatpush.bf16.msra.mxu0 %v2710
    %2725 = vmatpush.bf16.msra.mxu0 %v2709
    %2726 = vmatpush.bf16.msra.mxu0 %v2708
    %2727 = vmatmul.bf16.gmra.mxu0 %v2717
    %v2728 = vpop.f32.mrf.mxu0
    %v2729 = vadd.f32 %v2691, %v2728
    %v2730 = vpop.f32.mrf.mxu0
    %2731 = vdwg.mxu0
    %v2732 = vmax.f32 %v2729, 0.0
    %v2733 = vpack.c.bf16 %v2732, %v2732
    %v2734 = vld [vmem:[#allocation11] sm:$0xf]
    %v2735 = vld [vmem:[#allocation11 + $0x4] sm:$0xf]
    %v2736 = vld [vmem:[#allocation11 + $0x8] sm:$0xf]
    %v2737 = vld [vmem:[#allocation11 + $0xc] sm:$0xf]
    %v2738 = vld [vmem:[#allocation2 + $0xc] sm:$0x1]
    %v2739 = vperm.slane %v2738, 0
    %v2744 = vunpack.c.l.b16 %v2734
    %v2745 = vunpack.c.l.b16 %v2735
    %v2746 = vunpack.c.l.b16 %v2736
    %v2747 = vunpack.c.l.b16 %v2737
    %v2748 = vpack.c.b16 %v2745, %v2744
    %v2749 = vpack.c.b16 %v2747, %v2746
    %v2753 = vsel %vm476, %v2733, 0
    %2755 = vmatpush.bf16.msra.mxu0 0
    %2756 = vmatpush.bf16.msra.mxu0 0
    %2757 = vmatpush.bf16.msra.mxu0 0
    %2758 = vmatpush.bf16.msra.mxu0 0
    %2759 = vmatpush.bf16.msra.mxu0 0
    %2760 = vmatpush.bf16.msra.mxu0 0
    %2761 = vmatpush.bf16.msra.mxu0 %v2749
    %2762 = vmatpush.bf16.msra.mxu0 %v2748
    %2763 = vmatmul.bf16.gmra.mxu0 %v2753
    %v2764 = vpop.f32.mrf.mxu0
    %v2765 = vadd.f32 %v2739, %v2764
    %v2766 = vpop.f32.mrf.mxu0
    %2767 = vdwg.mxu0
    %2768 = vst [vmem:[#allocation13] sm:$0x3] %v2765
    // Predicated region
    $region90: #{tpu_custom_call.1} parent=1 // pred_check
      _
    $region91: #{tpu_custom_call.1} parent=1 // pred_check_branch
      %2770 = sbr.rel (0) target = $region93
    $region92: #{tpu_custom_call.1} parent=1 // pred_region
      %2772 = vsyncadd [#allocation4], 0
      %s2774 = sshll.u32 [#allocation13], 4
      %s2775 = int_to_ptr.vmem [resolvable:$true] %s2774
      %s2776 = sshll.u32 %s16, 4
      %s2777 = int_to_ptr.hbm [resolvable:$true] %s2776
      %2779 = dma.vmem_to_hbm [thread:$0]  %s2775, 32, %s2777, [#allocation4]
    $region93: #{tpu_custom_call.1} parent=1 // pred_fallthru
      _
    // Predicated region
    $region94: #{tpu_custom_call.1} parent=1 // pred_check
      _
    $region95: #{tpu_custom_call.1} parent=1 // pred_check_branch
      %2781 = sbr.rel (0) target = $region97
    $region96: #{tpu_custom_call.1} parent=1 // pred_region
      %2783 = dma.done [#allocation4], 32
    $region97: #{tpu_custom_call.1} parent=1 // pred_fallthru
      _
    %2784 = vsyncpa [#allocation3], 1
    %2785 = vsyncpa [#allocation6], 1
    %2786 = vsyncpa [#allocation9], 1
    %2787 = vsyncpa [#allocation12], 1
    %2788 = vsyncpa [#allocation4], 1

</llo_original>
